<compile_context>
chip_gen: v7x
topology: tpu7x:2x2x1
jax: 0.10.0
libtpu: 0.0.40
codegen_flags: <defaults>
</compile_context>

<pallas_src>
import jax
import jax.numpy as jnp
from jax import lax
from jax.experimental import pallas as pl
from jax.experimental.pallas import tpu as pltpu

F32 = jnp.float32
VMEM = pl.BlockSpec(memory_space=pltpu.MemorySpace.VMEM)


# ------------------------------ fused forward kernel ------------------------------
def _fused_kernel(x_ref, wc_ref, wx_ref, wrec_ref, aw1t_ref, aw2t_ref,
                  fw1t_ref, fw2t_ref, slab_ref, end_ref, attn_ref):
    B, L, Cin = x_ref.shape
    KcCin, C2 = wc_ref.shape
    Kc = KcCin // Cin                        # composed conv kernel size (K1 + K2 - 1)
    L2 = L - Kc + 1
    T = L2 // 2
    Ipool = C2 // 2                          # LSTM input size after channel pool
    Iin, H8 = wx_ref.shape
    H2 = H8 // 4                             # 2 * hidden_size
    H = H2 // 2
    Ah = aw1t_ref.shape[1]
    Hfc = fw1t_ref.shape[1]
    Nout = fw2t_ref.shape[1]

    # ---- tiny constants: one (8, W) slab, one constant per sublane row -----------
    slab = slab_ref[...]
    bc = slab[0:1, :C2]          # composed conv bias (even|odd channel order)
    bx = slab[1:2, :H8]          # LSTM input-projection bias (bih + bhh, both dirs)
    ab1 = slab[2:3, :Ah]         # attention W1 bias
    ab2 = slab[3:4, :Ah]         # attention W2 bias
    av = slab[4:5, :Ah]          # attention V weight (row)
    avb = slab[5:6, :1]          # attention V bias
    fb1 = slab[6:7, :Hfc]        # head fc1 bias
    fb2 = slab[7:8, :Nout]       # head fc2 bias

    x = x_ref[...]               # (B, L, Cin), channels-last throughout

    # ---- composed conv (conv2∘conv1) as ONE im2col matmul ------------------------
    xcat = jnp.concatenate([x[:, k:k + L2, :] for k in range(Kc)], axis=2)
    xcat = xcat.reshape(B * L2, Kc * Cin)
    conv = jnp.dot(xcat, wc_ref[...], preferred_element_type=F32) + bc     # (B*L2, C2)
    # channel half of MaxPool2d(2): even vs odd output channels (lane slices)
    ch_pooled = jnp.maximum(conv[:, :Ipool], conv[:, Ipool:])              # (B*L2, I)
    # length half of the pool: pair adjacent timesteps
    x3 = jnp.max(ch_pooled.reshape(B, T, 2, Ipool), axis=2)                # (B, T, I)

    # ---- Bi-LSTM ------------------------------------------------------------------
    # Input projection of BOTH directions hoisted out of the recurrence.
    # Column order: [i_f, i_r, f_f, f_r, g_f, g_r, o_f, o_r] (each H wide).
    P = jnp.dot(x3.reshape(B * T, Ipool), wx_ref[...],
                preferred_element_type=F32) + bx                           # (B*T, 8H)
    P = P.reshape(B, T, H8)
    colsP = lax.broadcasted_iota(jnp.int32, (1, 1, H8), 2)
    Pf = jnp.where((colsP % H2) < H, P, 0.0)     # forward-direction gate columns
    Pr = P - Pf                                  # reverse-direction gate columns
    # Per-step gate input (fwd time t, rev time T-1-t) hoisted OFF the serial chain.
    gin = [Pf[:, t, :] + Pr[:, T - 1 - t, :] for t in range(T)]

    col8 = lax.broadcasted_iota(jnp.int32, (B, H8), 1)
    is_g = (col8 >= 2 * H2) & (col8 < 3 * H2)    # g-gate (tanh) columns
    wrec = wrec_ref[...]                         # (2H, 8H) block-structured recurrent

    h = jnp.zeros((B, H2), F32)                  # state lanes = [h_fwd | h_rev]
    c = jnp.zeros((B, H2), F32)
    hs = []
    for t in range(T):                           # fused fwd(t) + rev(T-1-t) recurrence
        gates = gin[t] + jnp.dot(h, wrec, preferred_element_type=F32)      # (B, 8H)
        # 2 full-vreg EUP pushes (sigmoid + tanh) + 1 lane select instead of 4 pushes
        act = jnp.where(is_g, jnp.tanh(gates), jax.nn.sigmoid(gates))
        ig = act[:, 0 * H2:1 * H2]
        fg = act[:, 1 * H2:2 * H2]
        gg = act[:, 2 * H2:3 * H2]
        og = act[:, 3 * H2:4 * H2]
        c = fg * c + ig * gg
        h = og * jnp.tanh(c)
        hs.append(h)

    # x4[t]: forward half from step t, reverse half from step T-1-t (single stack).
    x4 = jnp.stack(
        [jnp.concatenate([hs[t][:, :H], hs[T - 1 - t][:, H:]], axis=1)
         for t in range(T)], axis=1)                                       # (B, T, 2H)

    # hn.view(B, 2H) exactly as PyTorch (raw view of (2, B, H)), built in registers.
    hn_rows = []
    for r in range(B):
        parts = []
        for s in range(2):
            q = 2 * r + s                        # chunk q of the flattened (2, B, H)
            d, b = q // B, q % B
            parts.append(h[b:b + 1, d * H:(d + 1) * H])
        hn_rows.append(jnp.concatenate(parts, axis=1))
    hn = jnp.concatenate(hn_rows, axis=0)                                  # (B, 2H)

    # ---- Bahdanau attention --------------------------------------------------------
    w1v = jnp.dot(x4.reshape(B * T, H2), aw1t_ref[...],
                  preferred_element_type=F32) + ab1                        # (B*T, Ah)
    w2h = jnp.dot(hn, aw2t_ref[...], preferred_element_type=F32) + ab2     # (B, Ah)
    z = jnp.tanh(w1v.reshape(B, T, Ah) + w2h[:, None, :])                  # (B, T, Ah)
    score = jnp.sum(z * av, axis=2) + avb                                  # (B, T)
    m = jnp.max(score, axis=1, keepdims=True)
    e = jnp.exp(score - m)
    attn = e / jnp.sum(e, axis=1, keepdims=True)       # exact softmax (correctness)
    attn_ref[...] = attn

    # context_vector: elementwise multiply + reduction (no per-batch MXU calls)
    ctx = jnp.sum(attn[:, :, None] * x4, axis=1)                           # (B, 2H)

    # ---- head: ReLU -> Dropout(eval identity) -> Linear -> ReLU -> Linear -> Softmax
    hh = jnp.maximum(ctx, 0.0)
    hh = jnp.dot(hh, fw1t_ref[...], preferred_element_type=F32) + fb1
    hh = jnp.maximum(hh, 0.0)
    logits = jnp.dot(hh, fw2t_ref[...], preferred_element_type=F32) + fb2
    m2 = jnp.max(logits, axis=1, keepdims=True)
    e2 = jnp.exp(logits - m2)
    end_ref[...] = e2 / jnp.sum(e2, axis=1, keepdims=True)  # exact softmax


# ------------------------------ jitted wrapper ------------------------------
def _forward_impl(params, x0):
    B, L, Cin = x0.shape
    Kc = params["wc"].shape[0] // Cin
    T = (L - Kc + 1) // 2
    order = ("wc", "wx", "wrec", "aw1t", "aw2t", "fw1t", "fw2t", "slab")
    end, attn = pl.pallas_call(
        _fused_kernel,
        out_shape=(jax.ShapeDtypeStruct((B, 2), F32),
                   jax.ShapeDtypeStruct((B, T), F32)),
        in_specs=[VMEM] * (1 + len(order)),
        out_specs=(VMEM, VMEM),
    )(x0, *[params[k] for k in order])
    return end, attn[:, :, None]                 # attention_weights (B, T, 1) as in torch


_forward = jax.jit(_forward_impl)


# ------------------------------ model (weights + offline repacking) ------------------------------
def _uniform(key, shape, bound):
    return jax.random.uniform(key, shape, F32, minval=-bound, maxval=bound)


class NewModel1:
    def __init__(self, out_channels1, out_channels2, kernel_size, input_size,
                 hidden_size, att_in_features, att_hidden_units, in_feature, key):
        ks = jax.random.split(key, 24)
        H = hidden_size
        H2, H8 = 2 * H, 8 * H
        K = kernel_size
        Iin = input_size
        Cin = 20
        C1, C2 = out_channels1, out_channels2
        Ah = att_hidden_units

        # ---- block2 convs (PyTorch layout), composed offline (no nonlinearity between) ----
        b1b = 1.0 / (Cin * K) ** 0.5
        conv1_w = _uniform(ks[0], (C1, Cin, K), b1b)
        conv1_b = _uniform(ks[1], (C1,), b1b)
        b2b = 1.0 / (C1 * K) ** 0.5
        conv2_w = _uniform(ks[2], (C2, C1, K), b2b)
        conv2_b = _uniform(ks[3], (C2,), b2b)
        Kc = 2 * K - 1
        Wc = jnp.zeros((C2, Cin, Kc), F32)
        for k2 in range(K):
            for k1 in range(K):
                Wc = Wc.at[:, :, k1 + k2].add(conv2_w[:, :, k2] @ conv1_w[:, :, k1])
        bcomp = conv2_b + conv2_w.sum(axis=2) @ conv1_b
        # even/odd output-channel reorder folds the channel half of MaxPool2d(2)
        Wc_eo = jnp.concatenate([Wc[0::2], Wc[1::2]], axis=0)          # (C2, Cin, Kc)
        bc_eo = jnp.concatenate([bcomp[0::2], bcomp[1::2]], axis=0)    # (C2,)
        wc = jnp.transpose(Wc_eo, (2, 1, 0)).reshape(Kc * Cin, C2)     # im2col weight

        # ---- bidirectional LSTM (PyTorch gate order i, f, g, o) ----
        bl = 1.0 / H ** 0.5
        wih_f = _uniform(ks[4], (4 * H, Iin), bl)
        whh_f = _uniform(ks[5], (4 * H, H), bl)
        bih_f = _uniform(ks[6], (4 * H,), bl)
        bhh_f = _uniform(ks[7], (4 * H,), bl)
        wih_r = _uniform(ks[8], (4 * H, Iin), bl)
        whh_r = _uniform(ks[9], (4 * H, H), bl)
        bih_r = _uniform(ks[10], (4 * H,), bl)
        bhh_r = _uniform(ks[11], (4 * H,), bl)
        # Combined gate columns [i_f, i_r, f_f, f_r, g_f, g_r, o_f, o_r] (each H wide);
        # recurrent weight block-structured over the [h_fwd | h_rev] state lanes.
        wx = jnp.zeros((Iin, H8), F32)
        bx = jnp.zeros((H8,), F32)
        wrec = jnp.zeros((H2, H8), F32)
        bsum_f = bih_f + bhh_f
        bsum_r = bih_r + bhh_r
        for g in range(4):
            cf = g * H2
            cr = g * H2 + H
            rows = slice(g * H, (g + 1) * H)
            wx = wx.at[:, cf:cf + H].set(wih_f[rows, :].T)
            wx = wx.at[:, cr:cr + H].set(wih_r[rows, :].T)
            bx = bx.at[cf:cf + H].set(bsum_f[rows])
            bx = bx.at[cr:cr + H].set(bsum_r[rows])
            wrec = wrec.at[0:H, cf:cf + H].set(whh_f[rows, :].T)
            wrec = wrec.at[H:H2, cr:cr + H].set(whh_r[rows, :].T)

        # ---- Bahdanau attention ----
        ba = 1.0 / att_in_features ** 0.5
        aw1t = _uniform(ks[12], (Ah, att_in_features), ba).T
        ab1 = _uniform(ks[13], (Ah,), ba)
        aw2t = _uniform(ks[14], (Ah, att_in_features), ba).T
        ab2 = _uniform(ks[15], (Ah,), ba)
        bv = 1.0 / Ah ** 0.5
        av = _uniform(ks[16], (Ah,), bv)
        avb = _uniform(ks[17], (1,), bv)

        # ---- block3 head ----
        bf1 = 1.0 / in_feature ** 0.5
        fw1t = _uniform(ks[18], (20, in_feature), bf1).T
        fb1 = _uniform(ks[19], (20,), bf1)
        bf2 = 1.0 / 20 ** 0.5
        fw2t = _uniform(ks[20], (2, 20), bf2).T
        fb2 = _uniform(ks[21], (2,), bf2)

        # ---- pack all tiny row constants into one (8, W) slab (one vreg / one DMA) ----
        need = max(C2, H8, Ah, 20, 2, 128)
        slab_w = -(-need // 128) * 128
        slab = jnp.zeros((8, slab_w), F32)
        slab = slab.at[0, :C2].set(bc_eo)
        slab = slab.at[1, :H8].set(bx)
        slab = slab.at[2, :Ah].set(ab1)
        slab = slab.at[3, :Ah].set(ab2)
        slab = slab.at[4, :Ah].set(av)
        slab = slab.at[5, :1].set(avb)
        slab = slab.at[6, :20].set(fb1)
        slab = slab.at[7, :2].set(fb2)

        self.params = dict(wc=wc, wx=wx, wrec=wrec, aw1t=aw1t, aw2t=aw2t,
                           fw1t=fw1t, fw2t=fw2t, slab=slab)

    def __call__(self, x0):
        return _forward(self.params, x0)


if __name__ == "__main__":
    # Small shapes consistent with the module constructor constraints:
    # (B, L, 20) input; two valid convs (k=3): L' = 20 - 4 = 16; MaxPool2d(2) over
    # (channels=16, length=16) -> (8, 8); LSTM input_size=8, hidden=16.
    B, L, C = 2, 20, 20
    out_channels1, out_channels2, kernel_size = 8, 16, 3
    input_size = out_channels2 // 2            # 8
    hidden_size = 16
    att_in_features = 2 * hidden_size          # 32
    att_hidden_units = 16
    in_feature = 2 * hidden_size               # 32

    model = NewModel1(out_channels1, out_channels2, kernel_size, input_size,
                      hidden_size, att_in_features, att_hidden_units, in_feature,
                      key=jax.random.PRNGKey(1))
    x0 = jax.random.normal(jax.random.PRNGKey(0), (B, L, C), F32)

    end, attention_weights = model(x0)
    jax.block_until_ready((end, attention_weights))
    assert end.shape == (B, 2)
    assert attention_weights.shape == (B, 8, 1)
    print("KERNEL_OK")
</pallas_src>

<mosaic_0001>
module attributes {stable_mosaic.version = 11 : i64} {
  func.func @_fused_kernel(%arg0: memref<2x20x20xf32, #tpu.memory_space<vmem>>, %arg1: memref<100x16xf32, #tpu.memory_space<vmem>>, %arg2: memref<8x128xf32, #tpu.memory_space<vmem>>, %arg3: memref<32x128xf32, #tpu.memory_space<vmem>>, %arg4: memref<32x16xf32, #tpu.memory_space<vmem>>, %arg5: memref<32x16xf32, #tpu.memory_space<vmem>>, %arg6: memref<32x20xf32, #tpu.memory_space<vmem>>, %arg7: memref<20x2xf32, #tpu.memory_space<vmem>>, %arg8: memref<8x128xf32, #tpu.memory_space<vmem>>, %arg9: memref<2x2xf32, #tpu.memory_space<vmem>>, %arg10: memref<2x8xf32, #tpu.memory_space<vmem>>) attributes {dimension_semantics = [], scalar_prefetch = 0 : i64, scratch_operands = 0 : i64, tpu.core_type = #tpu.core_type<tc>} {
    %c0 = arith.constant 0 : index
    %c0_0 = arith.constant 0 : index
    %0 = vector.load %arg8[%c0, %c0_0] : memref<8x128xf32, #tpu.memory_space<vmem>>, vector<8x128xf32>
    %1 = vector.extract_strided_slice %0 {offsets = [0, 0], sizes = [1, 16], strides = [1, 1]} : vector<8x128xf32> to vector<1x16xf32>
    %2 = vector.extract_strided_slice %0 {offsets = [1, 0], sizes = [1, 128], strides = [1, 1]} : vector<8x128xf32> to vector<1x128xf32>
    %3 = vector.extract_strided_slice %0 {offsets = [2, 0], sizes = [1, 16], strides = [1, 1]} : vector<8x128xf32> to vector<1x16xf32>
    %4 = vector.extract_strided_slice %0 {offsets = [3, 0], sizes = [1, 16], strides = [1, 1]} : vector<8x128xf32> to vector<1x16xf32>
    %5 = vector.extract_strided_slice %0 {offsets = [4, 0], sizes = [1, 16], strides = [1, 1]} : vector<8x128xf32> to vector<1x16xf32>
    %6 = vector.extract_strided_slice %0 {offsets = [5, 0], sizes = [1, 1], strides = [1, 1]} : vector<8x128xf32> to vector<1x1xf32>
    %7 = vector.extract_strided_slice %0 {offsets = [6, 0], sizes = [1, 20], strides = [1, 1]} : vector<8x128xf32> to vector<1x20xf32>
    %8 = vector.extract_strided_slice %0 {offsets = [7, 0], sizes = [1, 2], strides = [1, 1]} : vector<8x128xf32> to vector<1x2xf32>
    %c0_1 = arith.constant 0 : index
    %c0_2 = arith.constant 0 : index
    %c0_3 = arith.constant 0 : index
    %9 = vector.load %arg0[%c0_1, %c0_2, %c0_3] : memref<2x20x20xf32, #tpu.memory_space<vmem>>, vector<2x20x20xf32>
    %10 = vector.extract_strided_slice %9 {offsets = [0, 0, 0], sizes = [2, 16, 20], strides = [1, 1, 1]} : vector<2x20x20xf32> to vector<2x16x20xf32>
    %11 = vector.extract_strided_slice %9 {offsets = [0, 1, 0], sizes = [2, 16, 20], strides = [1, 1, 1]} : vector<2x20x20xf32> to vector<2x16x20xf32>
    %12 = vector.extract_strided_slice %9 {offsets = [0, 2, 0], sizes = [2, 16, 20], strides = [1, 1, 1]} : vector<2x20x20xf32> to vector<2x16x20xf32>
    %13 = vector.extract_strided_slice %9 {offsets = [0, 3, 0], sizes = [2, 16, 20], strides = [1, 1, 1]} : vector<2x20x20xf32> to vector<2x16x20xf32>
    %14 = vector.extract_strided_slice %9 {offsets = [0, 4, 0], sizes = [2, 16, 20], strides = [1, 1, 1]} : vector<2x20x20xf32> to vector<2x16x20xf32>
    %15 = tpu.concatenate %10, %11, %12, %13, %14 in 2 : vector<2x16x20xf32>, vector<2x16x20xf32>, vector<2x16x20xf32>, vector<2x16x20xf32>, vector<2x16x20xf32> -> vector<2x16x100xf32>
    %16 = vector.shape_cast %15 : vector<2x16x100xf32> to vector<32x100xf32>
    %c0_4 = arith.constant 0 : index
    %c0_5 = arith.constant 0 : index
    %17 = vector.load %arg1[%c0_4, %c0_5] : memref<100x16xf32, #tpu.memory_space<vmem>>, vector<100x16xf32>
    %cst = arith.constant dense<0.000000e+00> : vector<32x16xf32>
    %18 = tpu.matmul %16, %17, %cst {dimension_numbers = #tpu.dot_dimension_numbers<[1], [0], [0], [1], [0, 0, 1, 1], [], []>} : vector<32x100xf32>, vector<100x16xf32>, vector<32x16xf32> -> vector<32x16xf32>
    %19 = vector.broadcast %1 : vector<1x16xf32> to vector<32x16xf32>
    %20 = arith.addf %18, %19 : vector<32x16xf32>
    %21 = vector.extract_strided_slice %20 {offsets = [0, 0], sizes = [32, 8], strides = [1, 1]} : vector<32x16xf32> to vector<32x8xf32>
    %22 = vector.extract_strided_slice %20 {offsets = [0, 8], sizes = [32, 8], strides = [1, 1]} : vector<32x16xf32> to vector<32x8xf32>
    %23 = arith.maximumf %21, %22 : vector<32x8xf32>
    %24 = vector.shape_cast %23 : vector<32x8xf32> to vector<2x8x2x8xf32>
    %cst_6 = arith.constant dense<0xFF800000> : vector<2x8x8xf32>
    %25 = vector.multi_reduction <maximumf>, %24, %cst_6 [2] : vector<2x8x2x8xf32> to vector<2x8x8xf32>
    %26 = vector.shape_cast %25 : vector<2x8x8xf32> to vector<16x8xf32>
    %c0_7 = arith.constant 0 : index
    %c0_8 = arith.constant 0 : index
    %27 = vector.load %arg2[%c0_7, %c0_8] : memref<8x128xf32, #tpu.memory_space<vmem>>, vector<8x128xf32>
    %cst_9 = arith.constant dense<0.000000e+00> : vector<16x128xf32>
    %28 = tpu.matmul %26, %27, %cst_9 {dimension_numbers = #tpu.dot_dimension_numbers<[1], [0], [0], [1], [0, 0, 1, 1], [], []>} : vector<16x8xf32>, vector<8x128xf32>, vector<16x128xf32> -> vector<16x128xf32>
    %29 = vector.broadcast %2 : vector<1x128xf32> to vector<16x128xf32>
    %30 = arith.addf %28, %29 : vector<16x128xf32>
    %31 = vector.shape_cast %30 : vector<16x128xf32> to vector<2x8x128xf32>
    %32 = tpu.iota {dimensions = array<i32: 2>} : vector<1x1x128xi32>
    %c32_i32 = arith.constant 32 : i32
    %c0_i32 = arith.constant 0 : i32
    %33 = arith.cmpi eq, %c32_i32, %c0_i32 : i32
    %c1_i32 = arith.constant 1 : i32
    %34 = arith.select %33, %c1_i32, %c32_i32 : i32
    %35 = vector.broadcast %34 : i32 to vector<1x1x128xi32>
    %36 = arith.remsi %32, %35 : vector<1x1x128xi32>
    %c0_i32_10 = arith.constant 0 : i32
    %37 = vector.broadcast %c0_i32_10 : i32 to vector<1x1x128xi32>
    %38 = arith.cmpi ne, %36, %37 : vector<1x1x128xi32>
    %c0_i32_11 = arith.constant 0 : i32
    %39 = vector.broadcast %c0_i32_11 : i32 to vector<1x1x128xi32>
    %40 = arith.cmpi slt, %36, %39 : vector<1x1x128xi32>
    %c0_i32_12 = arith.constant 0 : i32
    %41 = arith.cmpi slt, %34, %c0_i32_12 : i32
    %42 = vector.broadcast %41 : i1 to vector<1x1x128xi1>
    %43 = vector.broadcast %42 : vector<1x1x128xi1> to vector<1x1x128xi1>
    %44 = arith.xori %40, %43 : vector<1x1x128xi1>
    %45 = arith.andi %44, %38 : vector<1x1x128xi1>
    %46 = vector.broadcast %34 : i32 to vector<1x1x128xi32>
    %47 = arith.addi %36, %46 : vector<1x1x128xi32>
    %48 = arith.select %45, %47, %36 : vector<1x1x128xi1>, vector<1x1x128xi32>
    %c16_i32 = arith.constant 16 : i32
    %49 = vector.broadcast %c16_i32 : i32 to vector<1x1x128xi32>
    %50 = arith.cmpi slt, %48, %49 : vector<1x1x128xi32>
    %cst_13 = arith.constant 0.000000e+00 : f32
    %51 = vector.shape_cast %50 : vector<1x1x128xi1> to vector<1x1x128xi1>
    %52 = vector.broadcast %51 : vector<1x1x128xi1> to vector<2x8x128xi1>
    %53 = vector.broadcast %cst_13 : f32 to vector<2x8x128xf32>
    %54 = arith.select %52, %31, %53 : vector<2x8x128xi1>, vector<2x8x128xf32>
    %55 = arith.subf %31, %54 : vector<2x8x128xf32>
    %56 = vector.extract_strided_slice %54 {offsets = [0, 0, 0], sizes = [2, 1, 128], strides = [1, 1, 1]} : vector<2x8x128xf32> to vector<2x1x128xf32>
    %57 = vector.shape_cast %56 : vector<2x1x128xf32> to vector<2x128xf32>
    %58 = vector.extract_strided_slice %55 {offsets = [0, 7, 0], sizes = [2, 1, 128], strides = [1, 1, 1]} : vector<2x8x128xf32> to vector<2x1x128xf32>
    %59 = vector.shape_cast %58 : vector<2x1x128xf32> to vector<2x128xf32>
    %60 = arith.addf %57, %59 : vector<2x128xf32>
    %61 = vector.extract_strided_slice %54 {offsets = [0, 1, 0], sizes = [2, 1, 128], strides = [1, 1, 1]} : vector<2x8x128xf32> to vector<2x1x128xf32>
    %62 = vector.shape_cast %61 : vector<2x1x128xf32> to vector<2x128xf32>
    %63 = vector.extract_strided_slice %55 {offsets = [0, 6, 0], sizes = [2, 1, 128], strides = [1, 1, 1]} : vector<2x8x128xf32> to vector<2x1x128xf32>
    %64 = vector.shape_cast %63 : vector<2x1x128xf32> to vector<2x128xf32>
    %65 = arith.addf %62, %64 : vector<2x128xf32>
    %66 = vector.extract_strided_slice %54 {offsets = [0, 2, 0], sizes = [2, 1, 128], strides = [1, 1, 1]} : vector<2x8x128xf32> to vector<2x1x128xf32>
    %67 = vector.shape_cast %66 : vector<2x1x128xf32> to vector<2x128xf32>
    %68 = vector.extract_strided_slice %55 {offsets = [0, 5, 0], sizes = [2, 1, 128], strides = [1, 1, 1]} : vector<2x8x128xf32> to vector<2x1x128xf32>
    %69 = vector.shape_cast %68 : vector<2x1x128xf32> to vector<2x128xf32>
    %70 = arith.addf %67, %69 : vector<2x128xf32>
    %71 = vector.extract_strided_slice %54 {offsets = [0, 3, 0], sizes = [2, 1, 128], strides = [1, 1, 1]} : vector<2x8x128xf32> to vector<2x1x128xf32>
    %72 = vector.shape_cast %71 : vector<2x1x128xf32> to vector<2x128xf32>
    %73 = vector.extract_strided_slice %55 {offsets = [0, 4, 0], sizes = [2, 1, 128], strides = [1, 1, 1]} : vector<2x8x128xf32> to vector<2x1x128xf32>
    %74 = vector.shape_cast %73 : vector<2x1x128xf32> to vector<2x128xf32>
    %75 = arith.addf %72, %74 : vector<2x128xf32>
    %76 = vector.extract_strided_slice %54 {offsets = [0, 4, 0], sizes = [2, 1, 128], strides = [1, 1, 1]} : vector<2x8x128xf32> to vector<2x1x128xf32>
    %77 = vector.shape_cast %76 : vector<2x1x128xf32> to vector<2x128xf32>
    %78 = vector.extract_strided_slice %55 {offsets = [0, 3, 0], sizes = [2, 1, 128], strides = [1, 1, 1]} : vector<2x8x128xf32> to vector<2x1x128xf32>
    %79 = vector.shape_cast %78 : vector<2x1x128xf32> to vector<2x128xf32>
    %80 = arith.addf %77, %79 : vector<2x128xf32>
    %81 = vector.extract_strided_slice %54 {offsets = [0, 5, 0], sizes = [2, 1, 128], strides = [1, 1, 1]} : vector<2x8x128xf32> to vector<2x1x128xf32>
    %82 = vector.shape_cast %81 : vector<2x1x128xf32> to vector<2x128xf32>
    %83 = vector.extract_strided_slice %55 {offsets = [0, 2, 0], sizes = [2, 1, 128], strides = [1, 1, 1]} : vector<2x8x128xf32> to vector<2x1x128xf32>
    %84 = vector.shape_cast %83 : vector<2x1x128xf32> to vector<2x128xf32>
    %85 = arith.addf %82, %84 : vector<2x128xf32>
    %86 = vector.extract_strided_slice %54 {offsets = [0, 6, 0], sizes = [2, 1, 128], strides = [1, 1, 1]} : vector<2x8x128xf32> to vector<2x1x128xf32>
    %87 = vector.shape_cast %86 : vector<2x1x128xf32> to vector<2x128xf32>
    %88 = vector.extract_strided_slice %55 {offsets = [0, 1, 0], sizes = [2, 1, 128], strides = [1, 1, 1]} : vector<2x8x128xf32> to vector<2x1x128xf32>
    %89 = vector.shape_cast %88 : vector<2x1x128xf32> to vector<2x128xf32>
    %90 = arith.addf %87, %89 : vector<2x128xf32>
    %91 = vector.extract_strided_slice %54 {offsets = [0, 7, 0], sizes = [2, 1, 128], strides = [1, 1, 1]} : vector<2x8x128xf32> to vector<2x1x128xf32>
    %92 = vector.shape_cast %91 : vector<2x1x128xf32> to vector<2x128xf32>
    %93 = vector.extract_strided_slice %55 {offsets = [0, 0, 0], sizes = [2, 1, 128], strides = [1, 1, 1]} : vector<2x8x128xf32> to vector<2x1x128xf32>
    %94 = vector.shape_cast %93 : vector<2x1x128xf32> to vector<2x128xf32>
    %95 = arith.addf %92, %94 : vector<2x128xf32>
    %96 = tpu.iota {dimensions = array<i32: 1>} : vector<2x128xi32>
    %c64_i32 = arith.constant 64 : i32
    %97 = vector.broadcast %c64_i32 : i32 to vector<2x128xi32>
    %98 = arith.cmpi sge, %96, %97 : vector<2x128xi32>
    %c96_i32 = arith.constant 96 : i32
    %99 = vector.broadcast %c96_i32 : i32 to vector<2x128xi32>
    %100 = arith.cmpi slt, %96, %99 : vector<2x128xi32>
    %101 = arith.andi %98, %100 : vector<2x128xi1>
    %c0_14 = arith.constant 0 : index
    %c0_15 = arith.constant 0 : index
    %102 = vector.load %arg3[%c0_14, %c0_15] : memref<32x128xf32, #tpu.memory_space<vmem>>, vector<32x128xf32>
    %cst_16 = arith.constant 0.000000e+00 : f32
    %103 = vector.broadcast %cst_16 : f32 to vector<2x32xf32>
    %cst_17 = arith.constant 0.000000e+00 : f32
    %104 = vector.broadcast %cst_17 : f32 to vector<2x32xf32>
    %cst_18 = arith.constant dense<0.000000e+00> : vector<2x128xf32>
    %105 = tpu.matmul %103, %102, %cst_18 {dimension_numbers = #tpu.dot_dimension_numbers<[1], [0], [0], [1], [0, 0, 1, 1], [], []>} : vector<2x32xf32>, vector<32x128xf32>, vector<2x128xf32> -> vector<2x128xf32>
    %106 = arith.addf %60, %105 : vector<2x128xf32>
    %107 = math.tanh %106 : vector<2x128xf32>
    %108 = arith.negf %106 : vector<2x128xf32>
    %109 = math.exp %108 : vector<2x128xf32>
    %cst_19 = arith.constant 1.000000e+00 : f32
    %110 = vector.broadcast %cst_19 : f32 to vector<2x128xf32>
    %111 = arith.addf %110, %109 : vector<2x128xf32>
    %112 = arith.divf %110, %111 : vector<2x128xf32>
    %113 = arith.select %101, %107, %112 : vector<2x128xi1>, vector<2x128xf32>
    %114 = vector.extract_strided_slice %113 {offsets = [0, 0], sizes = [2, 32], strides = [1, 1]} : vector<2x128xf32> to vector<2x32xf32>
    %115 = vector.extract_strided_slice %113 {offsets = [0, 32], sizes = [2, 32], strides = [1, 1]} : vector<2x128xf32> to vector<2x32xf32>
    %116 = vector.extract_strided_slice %113 {offsets = [0, 64], sizes = [2, 32], strides = [1, 1]} : vector<2x128xf32> to vector<2x32xf32>
    %117 = vector.extract_strided_slice %113 {offsets = [0, 96], sizes = [2, 32], strides = [1, 1]} : vector<2x128xf32> to vector<2x32xf32>
    %118 = arith.mulf %115, %104 : vector<2x32xf32>
    %119 = arith.mulf %114, %116 : vector<2x32xf32>
    %120 = arith.addf %118, %119 : vector<2x32xf32>
    %121 = math.tanh %120 : vector<2x32xf32>
    %122 = arith.mulf %117, %121 : vector<2x32xf32>
    %cst_20 = arith.constant dense<0.000000e+00> : vector<2x128xf32>
    %123 = tpu.matmul %122, %102, %cst_20 {dimension_numbers = #tpu.dot_dimension_numbers<[1], [0], [0], [1], [0, 0, 1, 1], [], []>} : vector<2x32xf32>, vector<32x128xf32>, vector<2x128xf32> -> vector<2x128xf32>
    %124 = arith.addf %65, %123 : vector<2x128xf32>
    %125 = math.tanh %124 : vector<2x128xf32>
    %126 = arith.negf %124 : vector<2x128xf32>
    %127 = math.exp %126 : vector<2x128xf32>
    %cst_21 = arith.constant 1.000000e+00 : f32
    %128 = vector.broadcast %cst_21 : f32 to vector<2x128xf32>
    %129 = arith.addf %128, %127 : vector<2x128xf32>
    %130 = arith.divf %128, %129 : vector<2x128xf32>
    %131 = arith.select %101, %125, %130 : vector<2x128xi1>, vector<2x128xf32>
    %132 = vector.extract_strided_slice %131 {offsets = [0, 0], sizes = [2, 32], strides = [1, 1]} : vector<2x128xf32> to vector<2x32xf32>
    %133 = vector.extract_strided_slice %131 {offsets = [0, 32], sizes = [2, 32], strides = [1, 1]} : vector<2x128xf32> to vector<2x32xf32>
    %134 = vector.extract_strided_slice %131 {offsets = [0, 64], sizes = [2, 32], strides = [1, 1]} : vector<2x128xf32> to vector<2x32xf32>
    %135 = vector.extract_strided_slice %131 {offsets = [0, 96], sizes = [2, 32], strides = [1, 1]} : vector<2x128xf32> to vector<2x32xf32>
    %136 = arith.mulf %133, %120 : vector<2x32xf32>
    %137 = arith.mulf %132, %134 : vector<2x32xf32>
    %138 = arith.addf %136, %137 : vector<2x32xf32>
    %139 = math.tanh %138 : vector<2x32xf32>
    %140 = arith.mulf %135, %139 : vector<2x32xf32>
    %cst_22 = arith.constant dense<0.000000e+00> : vector<2x128xf32>
    %141 = tpu.matmul %140, %102, %cst_22 {dimension_numbers = #tpu.dot_dimension_numbers<[1], [0], [0], [1], [0, 0, 1, 1], [], []>} : vector<2x32xf32>, vector<32x128xf32>, vector<2x128xf32> -> vector<2x128xf32>
    %142 = arith.addf %70, %141 : vector<2x128xf32>
    %143 = math.tanh %142 : vector<2x128xf32>
    %144 = arith.negf %142 : vector<2x128xf32>
    %145 = math.exp %144 : vector<2x128xf32>
    %cst_23 = arith.constant 1.000000e+00 : f32
    %146 = vector.broadcast %cst_23 : f32 to vector<2x128xf32>
    %147 = arith.addf %146, %145 : vector<2x128xf32>
    %148 = arith.divf %146, %147 : vector<2x128xf32>
    %149 = arith.select %101, %143, %148 : vector<2x128xi1>, vector<2x128xf32>
    %150 = vector.extract_strided_slice %149 {offsets = [0, 0], sizes = [2, 32], strides = [1, 1]} : vector<2x128xf32> to vector<2x32xf32>
    %151 = vector.extract_strided_slice %149 {offsets = [0, 32], sizes = [2, 32], strides = [1, 1]} : vector<2x128xf32> to vector<2x32xf32>
    %152 = vector.extract_strided_slice %149 {offsets = [0, 64], sizes = [2, 32], strides = [1, 1]} : vector<2x128xf32> to vector<2x32xf32>
    %153 = vector.extract_strided_slice %149 {offsets = [0, 96], sizes = [2, 32], strides = [1, 1]} : vector<2x128xf32> to vector<2x32xf32>
    %154 = arith.mulf %151, %138 : vector<2x32xf32>
    %155 = arith.mulf %150, %152 : vector<2x32xf32>
    %156 = arith.addf %154, %155 : vector<2x32xf32>
    %157 = math.tanh %156 : vector<2x32xf32>
    %158 = arith.mulf %153, %157 : vector<2x32xf32>
    %cst_24 = arith.constant dense<0.000000e+00> : vector<2x128xf32>
    %159 = tpu.matmul %158, %102, %cst_24 {dimension_numbers = #tpu.dot_dimension_numbers<[1], [0], [0], [1], [0, 0, 1, 1], [], []>} : vector<2x32xf32>, vector<32x128xf32>, vector<2x128xf32> -> vector<2x128xf32>
    %160 = arith.addf %75, %159 : vector<2x128xf32>
    %161 = math.tanh %160 : vector<2x128xf32>
    %162 = arith.negf %160 : vector<2x128xf32>
    %163 = math.exp %162 : vector<2x128xf32>
    %cst_25 = arith.constant 1.000000e+00 : f32
    %164 = vector.broadcast %cst_25 : f32 to vector<2x128xf32>
    %165 = arith.addf %164, %163 : vector<2x128xf32>
    %166 = arith.divf %164, %165 : vector<2x128xf32>
    %167 = arith.select %101, %161, %166 : vector<2x128xi1>, vector<2x128xf32>
    %168 = vector.extract_strided_slice %167 {offsets = [0, 0], sizes = [2, 32], strides = [1, 1]} : vector<2x128xf32> to vector<2x32xf32>
    %169 = vector.extract_strided_slice %167 {offsets = [0, 32], sizes = [2, 32], strides = [1, 1]} : vector<2x128xf32> to vector<2x32xf32>
    %170 = vector.extract_strided_slice %167 {offsets = [0, 64], sizes = [2, 32], strides = [1, 1]} : vector<2x128xf32> to vector<2x32xf32>
    %171 = vector.extract_strided_slice %167 {offsets = [0, 96], sizes = [2, 32], strides = [1, 1]} : vector<2x128xf32> to vector<2x32xf32>
    %172 = arith.mulf %169, %156 : vector<2x32xf32>
    %173 = arith.mulf %168, %170 : vector<2x32xf32>
    %174 = arith.addf %172, %173 : vector<2x32xf32>
    %175 = math.tanh %174 : vector<2x32xf32>
    %176 = arith.mulf %171, %175 : vector<2x32xf32>
    %cst_26 = arith.constant dense<0.000000e+00> : vector<2x128xf32>
    %177 = tpu.matmul %176, %102, %cst_26 {dimension_numbers = #tpu.dot_dimension_numbers<[1], [0], [0], [1], [0, 0, 1, 1], [], []>} : vector<2x32xf32>, vector<32x128xf32>, vector<2x128xf32> -> vector<2x128xf32>
    %178 = arith.addf %80, %177 : vector<2x128xf32>
    %179 = math.tanh %178 : vector<2x128xf32>
    %180 = arith.negf %178 : vector<2x128xf32>
    %181 = math.exp %180 : vector<2x128xf32>
    %cst_27 = arith.constant 1.000000e+00 : f32
    %182 = vector.broadcast %cst_27 : f32 to vector<2x128xf32>
    %183 = arith.addf %182, %181 : vector<2x128xf32>
    %184 = arith.divf %182, %183 : vector<2x128xf32>
    %185 = arith.select %101, %179, %184 : vector<2x128xi1>, vector<2x128xf32>
    %186 = vector.extract_strided_slice %185 {offsets = [0, 0], sizes = [2, 32], strides = [1, 1]} : vector<2x128xf32> to vector<2x32xf32>
    %187 = vector.extract_strided_slice %185 {offsets = [0, 32], sizes = [2, 32], strides = [1, 1]} : vector<2x128xf32> to vector<2x32xf32>
    %188 = vector.extract_strided_slice %185 {offsets = [0, 64], sizes = [2, 32], strides = [1, 1]} : vector<2x128xf32> to vector<2x32xf32>
    %189 = vector.extract_strided_slice %185 {offsets = [0, 96], sizes = [2, 32], strides = [1, 1]} : vector<2x128xf32> to vector<2x32xf32>
    %190 = arith.mulf %187, %174 : vector<2x32xf32>
    %191 = arith.mulf %186, %188 : vector<2x32xf32>
    %192 = arith.addf %190, %191 : vector<2x32xf32>
    %193 = math.tanh %192 : vector<2x32xf32>
    %194 = arith.mulf %189, %193 : vector<2x32xf32>
    %cst_28 = arith.constant dense<0.000000e+00> : vector<2x128xf32>
    %195 = tpu.matmul %194, %102, %cst_28 {dimension_numbers = #tpu.dot_dimension_numbers<[1], [0], [0], [1], [0, 0, 1, 1], [], []>} : vector<2x32xf32>, vector<32x128xf32>, vector<2x128xf32> -> vector<2x128xf32>
    %196 = arith.addf %85, %195 : vector<2x128xf32>
    %197 = math.tanh %196 : vector<2x128xf32>
    %198 = arith.negf %196 : vector<2x128xf32>
    %199 = math.exp %198 : vector<2x128xf32>
    %cst_29 = arith.constant 1.000000e+00 : f32
    %200 = vector.broadcast %cst_29 : f32 to vector<2x128xf32>
    %201 = arith.addf %200, %199 : vector<2x128xf32>
    %202 = arith.divf %200, %201 : vector<2x128xf32>
    %203 = arith.select %101, %197, %202 : vector<2x128xi1>, vector<2x128xf32>
    %204 = vector.extract_strided_slice %203 {offsets = [0, 0], sizes = [2, 32], strides = [1, 1]} : vector<2x128xf32> to vector<2x32xf32>
    %205 = vector.extract_strided_slice %203 {offsets = [0, 32], sizes = [2, 32], strides = [1, 1]} : vector<2x128xf32> to vector<2x32xf32>
    %206 = vector.extract_strided_slice %203 {offsets = [0, 64], sizes = [2, 32], strides = [1, 1]} : vector<2x128xf32> to vector<2x32xf32>
    %207 = vector.extract_strided_slice %203 {offsets = [0, 96], sizes = [2, 32], strides = [1, 1]} : vector<2x128xf32> to vector<2x32xf32>
    %208 = arith.mulf %205, %192 : vector<2x32xf32>
    %209 = arith.mulf %204, %206 : vector<2x32xf32>
    %210 = arith.addf %208, %209 : vector<2x32xf32>
    %211 = math.tanh %210 : vector<2x32xf32>
    %212 = arith.mulf %207, %211 : vector<2x32xf32>
    %cst_30 = arith.constant dense<0.000000e+00> : vector<2x128xf32>
    %213 = tpu.matmul %212, %102, %cst_30 {dimension_numbers = #tpu.dot_dimension_numbers<[1], [0], [0], [1], [0, 0, 1, 1], [], []>} : vector<2x32xf32>, vector<32x128xf32>, vector<2x128xf32> -> vector<2x128xf32>
    %214 = arith.addf %90, %213 : vector<2x128xf32>
    %215 = math.tanh %214 : vector<2x128xf32>
    %216 = arith.negf %214 : vector<2x128xf32>
    %217 = math.exp %216 : vector<2x128xf32>
    %cst_31 = arith.constant 1.000000e+00 : f32
    %218 = vector.broadcast %cst_31 : f32 to vector<2x128xf32>
    %219 = arith.addf %218, %217 : vector<2x128xf32>
    %220 = arith.divf %218, %219 : vector<2x128xf32>
    %221 = arith.select %101, %215, %220 : vector<2x128xi1>, vector<2x128xf32>
    %222 = vector.extract_strided_slice %221 {offsets = [0, 0], sizes = [2, 32], strides = [1, 1]} : vector<2x128xf32> to vector<2x32xf32>
    %223 = vector.extract_strided_slice %221 {offsets = [0, 32], sizes = [2, 32], strides = [1, 1]} : vector<2x128xf32> to vector<2x32xf32>
    %224 = vector.extract_strided_slice %221 {offsets = [0, 64], sizes = [2, 32], strides = [1, 1]} : vector<2x128xf32> to vector<2x32xf32>
    %225 = vector.extract_strided_slice %221 {offsets = [0, 96], sizes = [2, 32], strides = [1, 1]} : vector<2x128xf32> to vector<2x32xf32>
    %226 = arith.mulf %223, %210 : vector<2x32xf32>
    %227 = arith.mulf %222, %224 : vector<2x32xf32>
    %228 = arith.addf %226, %227 : vector<2x32xf32>
    %229 = math.tanh %228 : vector<2x32xf32>
    %230 = arith.mulf %225, %229 : vector<2x32xf32>
    %cst_32 = arith.constant dense<0.000000e+00> : vector<2x128xf32>
    %231 = tpu.matmul %230, %102, %cst_32 {dimension_numbers = #tpu.dot_dimension_numbers<[1], [0], [0], [1], [0, 0, 1, 1], [], []>} : vector<2x32xf32>, vector<32x128xf32>, vector<2x128xf32> -> vector<2x128xf32>
    %232 = arith.addf %95, %231 : vector<2x128xf32>
    %233 = math.tanh %232 : vector<2x128xf32>
    %234 = arith.negf %232 : vector<2x128xf32>
    %235 = math.exp %234 : vector<2x128xf32>
    %cst_33 = arith.constant 1.000000e+00 : f32
    %236 = vector.broadcast %cst_33 : f32 to vector<2x128xf32>
    %237 = arith.addf %236, %235 : vector<2x128xf32>
    %238 = arith.divf %236, %237 : vector<2x128xf32>
    %239 = arith.select %101, %233, %238 : vector<2x128xi1>, vector<2x128xf32>
    %240 = vector.extract_strided_slice %239 {offsets = [0, 0], sizes = [2, 32], strides = [1, 1]} : vector<2x128xf32> to vector<2x32xf32>
    %241 = vector.extract_strided_slice %239 {offsets = [0, 32], sizes = [2, 32], strides = [1, 1]} : vector<2x128xf32> to vector<2x32xf32>
    %242 = vector.extract_strided_slice %239 {offsets = [0, 64], sizes = [2, 32], strides = [1, 1]} : vector<2x128xf32> to vector<2x32xf32>
    %243 = vector.extract_strided_slice %239 {offsets = [0, 96], sizes = [2, 32], strides = [1, 1]} : vector<2x128xf32> to vector<2x32xf32>
    %244 = arith.mulf %241, %228 : vector<2x32xf32>
    %245 = arith.mulf %240, %242 : vector<2x32xf32>
    %246 = arith.addf %244, %245 : vector<2x32xf32>
    %247 = math.tanh %246 : vector<2x32xf32>
    %248 = arith.mulf %243, %247 : vector<2x32xf32>
    %249 = vector.extract_strided_slice %122 {offsets = [0, 0], sizes = [2, 16], strides = [1, 1]} : vector<2x32xf32> to vector<2x16xf32>
    %250 = vector.extract_strided_slice %248 {offsets = [0, 16], sizes = [2, 16], strides = [1, 1]} : vector<2x32xf32> to vector<2x16xf32>
    %251 = tpu.concatenate %249, %250 in 1 : vector<2x16xf32>, vector<2x16xf32> -> vector<2x32xf32>
    %252 = vector.extract_strided_slice %140 {offsets = [0, 0], sizes = [2, 16], strides = [1, 1]} : vector<2x32xf32> to vector<2x16xf32>
    %253 = vector.extract_strided_slice %230 {offsets = [0, 16], sizes = [2, 16], strides = [1, 1]} : vector<2x32xf32> to vector<2x16xf32>
    %254 = tpu.concatenate %252, %253 in 1 : vector<2x16xf32>, vector<2x16xf32> -> vector<2x32xf32>
    %255 = vector.extract_strided_slice %158 {offsets = [0, 0], sizes = [2, 16], strides = [1, 1]} : vector<2x32xf32> to vector<2x16xf32>
    %256 = vector.extract_strided_slice %212 {offsets = [0, 16], sizes = [2, 16], strides = [1, 1]} : vector<2x32xf32> to vector<2x16xf32>
    %257 = tpu.concatenate %255, %256 in 1 : vector<2x16xf32>, vector<2x16xf32> -> vector<2x32xf32>
    %258 = vector.extract_strided_slice %176 {offsets = [0, 0], sizes = [2, 16], strides = [1, 1]} : vector<2x32xf32> to vector<2x16xf32>
    %259 = vector.extract_strided_slice %194 {offsets = [0, 16], sizes = [2, 16], strides = [1, 1]} : vector<2x32xf32> to vector<2x16xf32>
    %260 = tpu.concatenate %258, %259 in 1 : vector<2x16xf32>, vector<2x16xf32> -> vector<2x32xf32>
    %261 = vector.extract_strided_slice %194 {offsets = [0, 0], sizes = [2, 16], strides = [1, 1]} : vector<2x32xf32> to vector<2x16xf32>
    %262 = vector.extract_strided_slice %176 {offsets = [0, 16], sizes = [2, 16], strides = [1, 1]} : vector<2x32xf32> to vector<2x16xf32>
    %263 = tpu.concatenate %261, %262 in 1 : vector<2x16xf32>, vector<2x16xf32> -> vector<2x32xf32>
    %264 = vector.extract_strided_slice %212 {offsets = [0, 0], sizes = [2, 16], strides = [1, 1]} : vector<2x32xf32> to vector<2x16xf32>
    %265 = vector.extract_strided_slice %158 {offsets = [0, 16], sizes = [2, 16], strides = [1, 1]} : vector<2x32xf32> to vector<2x16xf32>
    %266 = tpu.concatenate %264, %265 in 1 : vector<2x16xf32>, vector<2x16xf32> -> vector<2x32xf32>
    %267 = vector.extract_strided_slice %230 {offsets = [0, 0], sizes = [2, 16], strides = [1, 1]} : vector<2x32xf32> to vector<2x16xf32>
    %268 = vector.extract_strided_slice %140 {offsets = [0, 16], sizes = [2, 16], strides = [1, 1]} : vector<2x32xf32> to vector<2x16xf32>
    %269 = tpu.concatenate %267, %268 in 1 : vector<2x16xf32>, vector<2x16xf32> -> vector<2x32xf32>
    %270 = vector.extract_strided_slice %248 {offsets = [0, 0], sizes = [2, 16], strides = [1, 1]} : vector<2x32xf32> to vector<2x16xf32>
    %271 = vector.extract_strided_slice %122 {offsets = [0, 16], sizes = [2, 16], strides = [1, 1]} : vector<2x32xf32> to vector<2x16xf32>
    %272 = tpu.concatenate %270, %271 in 1 : vector<2x16xf32>, vector<2x16xf32> -> vector<2x32xf32>
    %273 = vector.shape_cast %251 : vector<2x32xf32> to vector<2x1x32xf32>
    %274 = vector.shape_cast %254 : vector<2x32xf32> to vector<2x1x32xf32>
    %275 = vector.shape_cast %257 : vector<2x32xf32> to vector<2x1x32xf32>
    %276 = vector.shape_cast %260 : vector<2x32xf32> to vector<2x1x32xf32>
    %277 = vector.shape_cast %263 : vector<2x32xf32> to vector<2x1x32xf32>
    %278 = vector.shape_cast %266 : vector<2x32xf32> to vector<2x1x32xf32>
    %279 = vector.shape_cast %269 : vector<2x32xf32> to vector<2x1x32xf32>
    %280 = vector.shape_cast %272 : vector<2x32xf32> to vector<2x1x32xf32>
    %281 = tpu.concatenate %273, %274, %275, %276, %277, %278, %279, %280 in 1 : vector<2x1x32xf32>, vector<2x1x32xf32>, vector<2x1x32xf32>, vector<2x1x32xf32>, vector<2x1x32xf32>, vector<2x1x32xf32>, vector<2x1x32xf32>, vector<2x1x32xf32> -> vector<2x8x32xf32>
    %282 = vector.extract_strided_slice %248 {offsets = [0, 0], sizes = [1, 16], strides = [1, 1]} : vector<2x32xf32> to vector<1x16xf32>
    %283 = vector.extract_strided_slice %248 {offsets = [1, 0], sizes = [1, 16], strides = [1, 1]} : vector<2x32xf32> to vector<1x16xf32>
    %284 = tpu.concatenate %282, %283 in 1 : vector<1x16xf32>, vector<1x16xf32> -> vector<1x32xf32>
    %285 = vector.extract_strided_slice %248 {offsets = [0, 16], sizes = [1, 16], strides = [1, 1]} : vector<2x32xf32> to vector<1x16xf32>
    %286 = vector.extract_strided_slice %248 {offsets = [1, 16], sizes = [1, 16], strides = [1, 1]} : vector<2x32xf32> to vector<1x16xf32>
    %287 = tpu.concatenate %285, %286 in 1 : vector<1x16xf32>, vector<1x16xf32> -> vector<1x32xf32>
    %288 = tpu.concatenate %284, %287 in 0 : vector<1x32xf32>, vector<1x32xf32> -> vector<2x32xf32>
    %289 = vector.shape_cast %281 : vector<2x8x32xf32> to vector<16x32xf32>
    %c0_34 = arith.constant 0 : index
    %c0_35 = arith.constant 0 : index
    %290 = vector.load %arg4[%c0_34, %c0_35] : memref<32x16xf32, #tpu.memory_space<vmem>>, vector<32x16xf32>
    %cst_36 = arith.constant dense<0.000000e+00> : vector<16x16xf32>
    %291 = tpu.matmul %289, %290, %cst_36 {dimension_numbers = #tpu.dot_dimension_numbers<[1], [0], [0], [1], [0, 0, 1, 1], [], []>} : vector<16x32xf32>, vector<32x16xf32>, vector<16x16xf32> -> vector<16x16xf32>
    %292 = vector.broadcast %3 : vector<1x16xf32> to vector<16x16xf32>
    %293 = arith.addf %291, %292 : vector<16x16xf32>
    %c0_37 = arith.constant 0 : index
    %c0_38 = arith.constant 0 : index
    %294 = vector.load %arg5[%c0_37, %c0_38] : memref<32x16xf32, #tpu.memory_space<vmem>>, vector<32x16xf32>
    %cst_39 = arith.constant dense<0.000000e+00> : vector<2x16xf32>
    %295 = tpu.matmul %288, %294, %cst_39 {dimension_numbers = #tpu.dot_dimension_numbers<[1], [0], [0], [1], [0, 0, 1, 1], [], []>} : vector<2x32xf32>, vector<32x16xf32>, vector<2x16xf32> -> vector<2x16xf32>
    %296 = vector.broadcast %4 : vector<1x16xf32> to vector<2x16xf32>
    %297 = arith.addf %295, %296 : vector<2x16xf32>
    %298 = vector.shape_cast %293 : vector<16x16xf32> to vector<2x8x16xf32>
    %299 = vector.shape_cast %297 : vector<2x16xf32> to vector<2x1x16xf32>
    %300 = vector.broadcast %299 : vector<2x1x16xf32> to vector<2x8x16xf32>
    %301 = arith.addf %298, %300 : vector<2x8x16xf32>
    %302 = math.tanh %301 : vector<2x8x16xf32>
    %303 = vector.shape_cast %5 : vector<1x16xf32> to vector<1x1x16xf32>
    %304 = vector.broadcast %303 : vector<1x1x16xf32> to vector<2x8x16xf32>
    %305 = arith.mulf %302, %304 : vector<2x8x16xf32>
    %cst_40 = arith.constant dense<0.000000e+00> : vector<2x8xf32>
    %306 = vector.multi_reduction <add>, %305, %cst_40 [2] : vector<2x8x16xf32> to vector<2x8xf32>
    %307 = vector.broadcast %6 : vector<1x1xf32> to vector<2x8xf32>
    %308 = arith.addf %306, %307 : vector<2x8xf32>
    %cst_41 = arith.constant dense<0xFF800000> : vector<2xf32>
    %309 = vector.multi_reduction <maximumf>, %308, %cst_41 [1] : vector<2x8xf32> to vector<2xf32>
    %310 = vector.shape_cast %309 : vector<2xf32> to vector<2x1xf32>
    %311 = vector.broadcast %310 : vector<2x1xf32> to vector<2x8xf32>
    %312 = arith.subf %308, %311 : vector<2x8xf32>
    %313 = math.exp %312 : vector<2x8xf32>
    %cst_42 = arith.constant dense<0.000000e+00> : vector<2xf32>
    %314 = vector.multi_reduction <add>, %313, %cst_42 [1] : vector<2x8xf32> to vector<2xf32>
    %315 = vector.shape_cast %314 : vector<2xf32> to vector<2x1xf32>
    %316 = vector.broadcast %315 : vector<2x1xf32> to vector<2x8xf32>
    %317 = arith.divf %313, %316 : vector<2x8xf32>
    %c0_43 = arith.constant 0 : index
    %c0_44 = arith.constant 0 : index
    %318 = vector.load %arg10[%c0_43, %c0_44] : memref<2x8xf32, #tpu.memory_space<vmem>>, vector<2x8xf32>
    tpu.vector_store %arg10[%c0_43, %c0_44], %317 {strides = array<i32>} : memref<2x8xf32, #tpu.memory_space<vmem>>, vector<2x8xf32>,
    %319 = vector.shape_cast %317 : vector<2x8xf32> to vector<2x8x1xf32>
    %320 = vector.broadcast %319 : vector<2x8x1xf32> to vector<2x8x32xf32>
    %321 = arith.mulf %320, %281 : vector<2x8x32xf32>
    %cst_45 = arith.constant dense<0.000000e+00> : vector<2x32xf32>
    %322 = vector.multi_reduction <add>, %321, %cst_45 [1] : vector<2x8x32xf32> to vector<2x32xf32>
    %cst_46 = arith.constant 0.000000e+00 : f32
    %323 = vector.broadcast %cst_46 : f32 to vector<2x32xf32>
    %324 = arith.maximumf %322, %323 : vector<2x32xf32>
    %c0_47 = arith.constant 0 : index
    %c0_48 = arith.constant 0 : index
    %325 = vector.load %arg6[%c0_47, %c0_48] : memref<32x20xf32, #tpu.memory_space<vmem>>, vector<32x20xf32>
    %cst_49 = arith.constant dense<0.000000e+00> : vector<2x20xf32>
    %326 = tpu.matmul %324, %325, %cst_49 {dimension_numbers = #tpu.dot_dimension_numbers<[1], [0], [0], [1], [0, 0, 1, 1], [], []>} : vector<2x32xf32>, vector<32x20xf32>, vector<2x20xf32> -> vector<2x20xf32>
    %327 = vector.broadcast %7 : vector<1x20xf32> to vector<2x20xf32>
    %328 = arith.addf %326, %327 : vector<2x20xf32>
    %cst_50 = arith.constant 0.000000e+00 : f32
    %329 = vector.broadcast %cst_50 : f32 to vector<2x20xf32>
    %330 = arith.maximumf %328, %329 : vector<2x20xf32>
    %c0_51 = arith.constant 0 : index
    %c0_52 = arith.constant 0 : index
    %331 = vector.load %arg7[%c0_51, %c0_52] : memref<20x2xf32, #tpu.memory_space<vmem>>, vector<20x2xf32>
    %cst_53 = arith.constant dense<0.000000e+00> : vector<2x2xf32>
    %332 = tpu.matmul %330, %331, %cst_53 {dimension_numbers = #tpu.dot_dimension_numbers<[1], [0], [0], [1], [0, 0, 1, 1], [], []>} : vector<2x20xf32>, vector<20x2xf32>, vector<2x2xf32> -> vector<2x2xf32>
    %333 = vector.broadcast %8 : vector<1x2xf32> to vector<2x2xf32>
    %334 = arith.addf %332, %333 : vector<2x2xf32>
    %cst_54 = arith.constant dense<0xFF800000> : vector<2xf32>
    %335 = vector.multi_reduction <maximumf>, %334, %cst_54 [1] : vector<2x2xf32> to vector<2xf32>
    %336 = vector.shape_cast %335 : vector<2xf32> to vector<2x1xf32>
    %337 = vector.broadcast %336 : vector<2x1xf32> to vector<2x2xf32>
    %338 = arith.subf %334, %337 : vector<2x2xf32>
    %339 = math.exp %338 : vector<2x2xf32>
    %cst_55 = arith.constant dense<0.000000e+00> : vector<2xf32>
    %340 = vector.multi_reduction <add>, %339, %cst_55 [1] : vector<2x2xf32> to vector<2xf32>
    %341 = vector.shape_cast %340 : vector<2xf32> to vector<2x1xf32>
    %342 = vector.broadcast %341 : vector<2x1xf32> to vector<2x2xf32>
    %343 = arith.divf %339, %342 : vector<2x2xf32>
    %c0_56 = arith.constant 0 : index
    %c0_57 = arith.constant 0 : index
    %344 = vector.load %arg9[%c0_56, %c0_57] : memref<2x2xf32, #tpu.memory_space<vmem>>, vector<2x2xf32>
    tpu.vector_store %arg9[%c0_56, %c0_57], %343 {strides = array<i32>} : memref<2x2xf32, #tpu.memory_space<vmem>>, vector<2x2xf32>,
    return
  }
}

</mosaic_0001>

<llo_original>
// kernel: _forward_impl.1
$region0: #{_forward_impl.1}
  #allocation0 [shape = 'u32[]', space=smem, size = 0x4, offset = 0x4, fixed_abs, tag = 'smem constant byte address 0x4 - core index']
  #allocation1 [shape = 'u32[144,128]{1,0:T(1,128)}', space=vmem, size = 0x12000, scoped, tag = 'internal scratch']
  %s0 = inlined_call_operand.vmem [shape: f32[2,20,20], index: 0, kind: input, shape index: {}]
  %s1 = inlined_call_operand.vmem [shape: f32[100,16], index: 1, kind: input, shape index: {}]
  %s2 = inlined_call_operand.vmem [shape: f32[8,128], index: 2, kind: input, shape index: {}]
  %s3 = inlined_call_operand.vmem [shape: f32[32,128], index: 3, kind: input, shape index: {}]
  %s4 = inlined_call_operand.vmem [shape: f32[32,16], index: 4, kind: input, shape index: {}]
  %s5 = inlined_call_operand.vmem [shape: f32[32,16], index: 5, kind: input, shape index: {}]
  %s6 = inlined_call_operand.vmem [shape: f32[32,20], index: 6, kind: input, shape index: {}]
  %s7 = inlined_call_operand.vmem [shape: f32[20,2], index: 7, kind: input, shape index: {}]
  %s8 = inlined_call_operand.vmem [shape: f32[8,128], index: 8, kind: input, shape index: {}]
  %s9 = inlined_call_operand.hbm [shape: f32[2,2], index: 9, kind: output, shape index: {0}]
  %s10 = inlined_call_operand.hbm [shape: f32[2,8], index: 10, kind: output, shape index: {1}]
  %11 = xla_tuple %s9, %s10
  %s12 = sld [smem:[#allocation0]]
  $region54: #{_forward_impl.1} parent=0
    _
  %s14 = ssub.s32 1, %s12
  %s15 = scalar_select 0, %s14, %s12
  $region1: #{_forward_impl.1} parent=0
    #allocation2 [shape = 'u8[1024]{0}', space=vmem, size = 0x400, scoped, tag = 'output window, operand 0, single buffered']
    #allocation3 [shape = 's32[1]{0}', space=sflag, size = 0x4, scoped, tag = 'scoped memory for _forward_impl.1']
    #allocation4 [shape = 'u8[1024]{0}', space=vmem, size = 0x400, scoped, tag = 'output window, operand 1, single buffered']
    #allocation5 [shape = 's32[1]{0}', space=sflag, size = 0x4, scoped, tag = 'scoped memory for _forward_impl.1']
    %16 = vsyncpa [#allocation3], 0
    %17 = vsyncpa [#allocation5], 0
    // Predicated region
    $region2: #{_forward_impl.1} parent=1 // pred_check
      _
    $region3: #{_forward_impl.1} parent=1 // pred_check_branch
      %19 = sbr.rel (0) target = $region5
    $region4: #{_forward_impl.1} parent=1 // pred_region
      _
    $region5: #{_forward_impl.1} parent=1 // pred_fallthru
      _
    // Predicated region
    $region6: #{_forward_impl.1} parent=1 // pred_check
      _
    $region7: #{_forward_impl.1} parent=1 // pred_check_branch
      %21 = sbr.rel (0) target = $region9
    $region8: #{_forward_impl.1} parent=1 // pred_region
      _
    $region9: #{_forward_impl.1} parent=1 // pred_fallthru
      _
    // Predicated region
    $region10: #{_forward_impl.1} parent=1 // pred_check
      _
    $region11: #{_forward_impl.1} parent=1 // pred_check_branch
      %23 = sbr.rel (0) target = $region13
    $region12: #{_forward_impl.1} parent=1 // pred_region
      _
    $region13: #{_forward_impl.1} parent=1 // pred_fallthru
      _
    // Predicated region
    $region14: #{_forward_impl.1} parent=1 // pred_check
      _
    $region15: #{_forward_impl.1} parent=1 // pred_check_branch
      %25 = sbr.rel (0) target = $region17
    $region16: #{_forward_impl.1} parent=1 // pred_region
      _
    $region17: #{_forward_impl.1} parent=1 // pred_fallthru
      _
    // Predicated region
    $region18: #{_forward_impl.1} parent=1 // pred_check
      _
    $region19: #{_forward_impl.1} parent=1 // pred_check_branch
      %27 = sbr.rel (0) target = $region21
    $region20: #{_forward_impl.1} parent=1 // pred_region
      _
    $region21: #{_forward_impl.1} parent=1 // pred_fallthru
      _
    // Predicated region
    $region22: #{_forward_impl.1} parent=1 // pred_check
      _
    $region23: #{_forward_impl.1} parent=1 // pred_check_branch
      %29 = sbr.rel (0) target = $region25
    $region24: #{_forward_impl.1} parent=1 // pred_region
      _
    $region25: #{_forward_impl.1} parent=1 // pred_fallthru
      _
    // Predicated region
    $region26: #{_forward_impl.1} parent=1 // pred_check
      _
    $region27: #{_forward_impl.1} parent=1 // pred_check_branch
      %31 = sbr.rel (0) target = $region29
    $region28: #{_forward_impl.1} parent=1 // pred_region
      _
    $region29: #{_forward_impl.1} parent=1 // pred_fallthru
      _
    // Predicated region
    $region30: #{_forward_impl.1} parent=1 // pred_check
      _
    $region31: #{_forward_impl.1} parent=1 // pred_check_branch
      %33 = sbr.rel (0) target = $region33
    $region32: #{_forward_impl.1} parent=1 // pred_region
      _
    $region33: #{_forward_impl.1} parent=1 // pred_fallthru
      _
    // Predicated region
    $region34: #{_forward_impl.1} parent=1 // pred_check
      _
    $region35: #{_forward_impl.1} parent=1 // pred_check_branch
      %35 = sbr.rel (0) target = $region37
    $region36: #{_forward_impl.1} parent=1 // pred_region
      _
    $region37: #{_forward_impl.1} parent=1 // pred_fallthru
      _
    %v36 = vld [vmem:[%s8] sm:$0xff]
    %v37 = vld [vmem:[%s0] sm:$0xff]
    %v38 = vld [vmem:[%s0 + $0x8] sm:$0xff]
    %v39 = vld [vmem:[%s0 + $0x10] sm:$0xf]
    %v40 = vld [vmem:[%s0 + $0x18] sm:$0xff]
    %v41 = vld [vmem:[%s0 + $0x20] sm:$0xff]
    %v42 = vld [vmem:[%s0 + $0x28] sm:$0xf]
    %vm49 = vcmask 1046528
    %v50 = vrot.slane %v37, 1
    %v51 = vrot.slane %v38, 1
    %v52 = vsel %vm49, %v50, %v51
    %v53 = vrot.slane %v39, 1
    %v54 = vsel %vm49, %v51, %v53
    %v55 = vrot.slane %v40, 1
    %v56 = vrot.slane %v41, 1
    %v57 = vsel %vm49, %v55, %v56
    %v58 = vrot.slane %v42, 1
    %v59 = vsel %vm49, %v56, %v58
    %60 = vrot.lane.b32.xlu0 %v52, 20
    %v61 = vpop.permute.xlu0 %60
    %62 = vrot.lane.b32.xlu0 %v54, 20
    %v63 = vpop.permute.xlu0 %62
    %64 = vrot.lane.b32.xlu0 %v57, 20
    %v65 = vpop.permute.xlu0 %64
    %66 = vrot.lane.b32.xlu0 %v59, 20
    %v67 = vpop.permute.xlu0 %66
    %vm72 = vcmask 1045504
    %v73 = vrot.slane %v37, 2
    %v74 = vrot.slane %v38, 2
    %v75 = vsel %vm72, %v73, %v74
    %v76 = vrot.slane %v39, 2
    %v77 = vsel %vm72, %v74, %v76
    %v78 = vrot.slane %v40, 2
    %v79 = vrot.slane %v41, 2
    %v80 = vsel %vm72, %v78, %v79
    %v81 = vrot.slane %v42, 2
    %v82 = vsel %vm72, %v79, %v81
    %83 = vrot.lane.b32.xlu0 %v75, 40
    %v84 = vpop.permute.xlu0 %83
    %85 = vrot.lane.b32.xlu0 %v77, 40
    %v86 = vpop.permute.xlu0 %85
    %87 = vrot.lane.b32.xlu0 %v80, 40
    %v88 = vpop.permute.xlu0 %87
    %89 = vrot.lane.b32.xlu0 %v82, 40
    %v90 = vpop.permute.xlu0 %89
    %vm95 = vcmask 1044480
    %v96 = vrot.slane %v37, 3
    %v97 = vrot.slane %v38, 3
    %v98 = vsel %vm95, %v96, %v97
    %v99 = vrot.slane %v39, 3
    %v100 = vsel %vm95, %v97, %v99
    %v101 = vrot.slane %v40, 3
    %v102 = vrot.slane %v41, 3
    %v103 = vsel %vm95, %v101, %v102
    %v104 = vrot.slane %v42, 3
    %v105 = vsel %vm95, %v102, %v104
    %106 = vrot.lane.b32.xlu0 %v98, 60
    %v107 = vpop.permute.xlu0 %106
    %108 = vrot.lane.b32.xlu0 %v100, 60
    %v109 = vpop.permute.xlu0 %108
    %110 = vrot.lane.b32.xlu0 %v103, 60
    %v111 = vpop.permute.xlu0 %110
    %112 = vrot.lane.b32.xlu0 %v105, 60
    %v113 = vpop.permute.xlu0 %112
    %vm118 = vcmask 1043456
    %v119 = vrot.slane %v37, 4
    %v120 = vrot.slane %v38, 4
    %v121 = vsel %vm118, %v119, %v120
    %v122 = vrot.slane %v39, 4
    %v123 = vsel %vm118, %v120, %v122
    %v124 = vrot.slane %v40, 4
    %v125 = vrot.slane %v41, 4
    %v126 = vsel %vm118, %v124, %v125
    %v127 = vrot.slane %v42, 4
    %v128 = vsel %vm118, %v125, %v127
    %129 = vrot.lane.b32.xlu0 %v121, 80
    %v130 = vpop.permute.xlu0 %129
    %131 = vrot.lane.b32.xlu0 %v123, 80
    %v132 = vpop.permute.xlu0 %131
    %133 = vrot.lane.b32.xlu0 %v126, 80
    %v134 = vpop.permute.xlu0 %133
    %135 = vrot.lane.b32.xlu0 %v128, 80
    %v136 = vpop.permute.xlu0 %135
    %vm141 = vcmask 162816
    %v142 = vsel %vm141, %v37, %v61
    %v143 = vsel %vm141, %v38, %v63
    %v144 = vsel %vm141, %v40, %v65
    %v145 = vsel %vm141, %v41, %v67
    %vm146 = vcmask 326656
    %v147 = vsel %vm146, %v142, %v84
    %v148 = vsel %vm146, %v143, %v86
    %v149 = vsel %vm146, %v144, %v88
    %v150 = vsel %vm146, %v145, %v90
    %vm151 = vcmask 490496
    %v152 = vsel %vm151, %v147, %v107
    %v153 = vsel %vm151, %v148, %v109
    %v154 = vsel %vm151, %v149, %v111
    %v155 = vsel %vm151, %v150, %v113
    %vm156 = vcmask 654336
    %v157 = vsel %vm156, %v152, %v130
    %v158 = vsel %vm156, %v153, %v132
    %v159 = vsel %vm156, %v154, %v134
    %v160 = vsel %vm156, %v155, %v136
    %v161 = vld [vmem:[%s1] sm:$0xff]
    %v162 = vld [vmem:[%s1 + $0x8] sm:$0xff]
    %v163 = vld [vmem:[%s1 + $0x10] sm:$0xff]
    %v164 = vld [vmem:[%s1 + $0x18] sm:$0xff]
    %v165 = vld [vmem:[%s1 + $0x20] sm:$0xff]
    %v166 = vld [vmem:[%s1 + $0x28] sm:$0xff]
    %v167 = vld [vmem:[%s1 + $0x30] sm:$0xff]
    %v168 = vld [vmem:[%s1 + $0x38] sm:$0xff]
    %v169 = vld [vmem:[%s1 + $0x40] sm:$0xff]
    %v170 = vld [vmem:[%s1 + $0x48] sm:$0xff]
    %v171 = vld [vmem:[%s1 + $0x50] sm:$0xff]
    %v172 = vld [vmem:[%s1 + $0x58] sm:$0xff]
    %v173 = vld [vmem:[%s1 + $0x60] sm:$0xf]
    %v174 = vlaneseq
    %v175 = vshrl.u32 %v174, 7
    %v176 = vsub.s32 0, %v175
    %v177 = vrot.slane %v36, %v176
    %vm178 = vcmask 818176
    %v180 = vsel %vm178, %v157, 0
    %v183 = vsel %vm178, %v158, 0
    %v186 = vsel %vm178, %v159, 0
    %v189 = vsel %vm178, %v160, 0
    %v192 = vsel %vm118, %v173, 0
    %194 = vmatprep.subr.mxu0 0.0
    %195 = vmatpush1.msra.mxu0 %v161
    %196 = vmatprep.subr.mxu0 0.0
    %197 = vmatpush1.msra.mxu0 %v162
    %198 = vmatprep.subr.mxu0 0.0
    %199 = vmatpush1.msra.mxu0 %v163
    %200 = vmatprep.subr.mxu0 0.0
    %201 = vmatpush1.msra.mxu0 %v164
    %202 = vmatprep.subr.mxu0 0.0
    %203 = vmatpush1.msra.mxu0 %v165
    %204 = vmatprep.subr.mxu0 0.0
    %205 = vmatpush1.msra.mxu0 %v166
    %206 = vmatprep.subr.mxu0 0.0
    %207 = vmatpush1.msra.mxu0 %v167
    %208 = vmatprep.subr.mxu0 0.0
    %209 = vmatpush1.msra.mxu0 %v168
    %210 = vmatprep.subr.mxu0 0.0
    %211 = vmatpush1.msra.mxu0 %v169
    %212 = vmatprep.subr.mxu0 0.0
    %213 = vmatpush1.msra.mxu0 %v170
    %214 = vmatprep.subr.mxu0 0.0
    %215 = vmatpush1.msra.mxu0 %v171
    %216 = vmatprep.subr.mxu0 0.0
    %217 = vmatpush1.msra.mxu0 %v172
    %218 = vmatprep.subr.mxu0 0.0
    %219 = vmatpush1.msra.mxu0 %v192
    %220 = vmatprep.subr.mxu0 0.0
    %221 = vmatpush1.msra.mxu0 0.0
    %222 = vmatprep.subr.mxu0 0.0
    %223 = vmatpush1.msra.mxu0 0.0
    %224 = vmatprep.subr.mxu0 0.0
    %225 = vmatpush1.msra.mxu0 0.0
    %226 = vmatprep.subr.mxu0 0.0
    %227 = vmatpush1.msra.mxu0 0.0
    %228 = vmatprep.subr.mxu0 0.0
    %229 = vmatpush1.msra.mxu0 0.0
    %230 = vmatprep.subr.mxu0 0.0
    %231 = vmatpush1.msra.mxu0 0.0
    %232 = vmatprep.subr.mxu0 0.0
    %233 = vmatpush1.msra.mxu0 0.0
    %234 = vmatprep.subr.mxu0 0.0
    %235 = vmatpush1.msra.mxu0 0.0
    %236 = vmatprep.subr.mxu0 0.0
    %237 = vmatpush1.msra.mxu0 0.0
    %238 = vmatprep.subr.mxu0 0.0
    %239 = vmatpush1.msra.mxu0 0.0
    %240 = vmatprep.subr.mxu0 0.0
    %241 = vmatpush1.msra.mxu0 0.0
    %242 = vmatprep.subr.mxu0 0.0
    %243 = vmatpush1.msra.mxu0 0.0
    %244 = vmatprep.subr.mxu0 0.0
    %245 = vmatpush1.msra.mxu0 0.0
    %246 = vmatprep.subr.mxu0 0.0
    %247 = vmatpush1.msra.mxu0 0.0
    %248 = vmatprep.subr.mxu0 0.0
    %249 = vmatpush1.msra.mxu0 0.0
    %250 = vmatprep.subr.mxu0 0.0
    %251 = vmatpush1.msra.mxu0 0.0
    %252 = vmatprep.subr.mxu0 0.0
    %253 = vmatpush1.msra.mxu0 0.0
    %254 = vmatprep.subr.mxu0 0.0
    %255 = vmatpush1.msra.mxu0 0.0
    %256 = vmatprep.subr.mxu0 0.0
    %257 = vmatpush1.msra.mxu0 0.0
    %258 = vmatprep.mubr.f32.mxu0 0.0
    %259 = vmatmul.mubr.f32.gmra.mrb[0].mxu0 %v180
    %v260 = vpop.f32.mrb[0].mxu0
    %v261 = vadd.f32 %v177, %v260
    %v262 = vpop.f32.mrb[0].mxu0
    %263 = vmatprep.mubr.f32.mxu0 0.0
    %264 = vmatmul.mubr.f32.gmra.mrb[0].mxu0 %v183
    %v265 = vpop.f32.mrb[0].mxu0
    %v266 = vadd.f32 %v177, %v265
    %v267 = vpop.f32.mrb[0].mxu0
    %268 = vmatprep.mubr.f32.mxu0 0.0
    %269 = vmatmul.mubr.f32.gmra.mrb[0].mxu0 %v186
    %v270 = vpop.f32.mrb[0].mxu0
    %v271 = vadd.f32 %v177, %v270
    %v272 = vpop.f32.mrb[0].mxu0
    %273 = vmatprep.mubr.f32.mxu0 0.0
    %274 = vmatmul.mubr.f32.gmra.mrb[0].mxu0 %v189
    %v275 = vpop.f32.mrb[0].mxu0
    %v276 = vadd.f32 %v177, %v275
    %v277 = vpop.f32.mrb[0].mxu0
    %278 = vdwg.mxu0
    %283 = vrot.lane.b32.xlu0 %v261, 120
    %v284 = vpop.permute.xlu0 %283
    %285 = vrot.lane.b32.xlu0 %v266, 120
    %v286 = vpop.permute.xlu0 %285
    %287 = vrot.lane.b32.xlu0 %v271, 120
    %v288 = vpop.permute.xlu0 %287
    %289 = vrot.lane.b32.xlu0 %v276, 120
    %v290 = vpop.permute.xlu0 %289
    %v295 = vmax.f32 %v261, %v284
    %v296 = vmax.f32 %v266, %v286
    %v297 = vmax.f32 %v271, %v288
    %v298 = vmax.f32 %v276, %v290
    %v303 = vcombine.high %v295, %v295
    %v305 = vunpack.c.l.s4 1983009808
    %v306 = vunpack.c.0.s8 %v305
    %v307 = vlaneseq
    %v308 = vshrl.u32 %v307, 7
    %v309 = vsub.s32 %v306, %v308
    %v310 = vrot.slane %v295, %v309
    %v312 = vunpack.c.l.s4 1983009808
    %v313 = vunpack.c.0.s8 %v312
    %v314 = vlaneseq
    %v315 = vshrl.u32 %v314, 7
    %v316 = vsub.s32 %v313, %v315
    %v317 = vrot.slane %v303, %v316
    %v318 = vcombine.high %v310, %v310
    %v319 = vcombine.high %v317, %v317
    %v320 = vcombine.high %v296, %v296
    %v322 = vunpack.c.l.s4 1983009808
    %v323 = vunpack.c.0.s8 %v322
    %v324 = vlaneseq
    %v325 = vshrl.u32 %v324, 7
    %v326 = vsub.s32 %v323, %v325
    %v327 = vrot.slane %v296, %v326
    %v329 = vunpack.c.l.s4 1983009808
    %v330 = vunpack.c.0.s8 %v329
    %v331 = vlaneseq
    %v332 = vshrl.u32 %v331, 7
    %v333 = vsub.s32 %v330, %v332
    %v334 = vrot.slane %v320, %v333
    %v335 = vcombine.high %v327, %v327
    %v336 = vcombine.high %v334, %v334
    %v337 = vcombine.high %v297, %v297
    %v339 = vunpack.c.l.s4 1983009808
    %v340 = vunpack.c.0.s8 %v339
    %v341 = vlaneseq
    %v342 = vshrl.u32 %v341, 7
    %v343 = vsub.s32 %v340, %v342
    %v344 = vrot.slane %v297, %v343
    %v346 = vunpack.c.l.s4 1983009808
    %v347 = vunpack.c.0.s8 %v346
    %v348 = vlaneseq
    %v349 = vshrl.u32 %v348, 7
    %v350 = vsub.s32 %v347, %v349
    %v351 = vrot.slane %v337, %v350
    %v352 = vcombine.high %v344, %v344
    %v353 = vcombine.high %v351, %v351
    %v354 = vcombine.high %v298, %v298
    %v356 = vunpack.c.l.s4 1983009808
    %v357 = vunpack.c.0.s8 %v356
    %v358 = vlaneseq
    %v359 = vshrl.u32 %v358, 7
    %v360 = vsub.s32 %v357, %v359
    %v361 = vrot.slane %v298, %v360
    %v363 = vunpack.c.l.s4 1983009808
    %v364 = vunpack.c.0.s8 %v363
    %v365 = vlaneseq
    %v366 = vshrl.u32 %v365, 7
    %v367 = vsub.s32 %v364, %v366
    %v368 = vrot.slane %v354, %v367
    %v369 = vcombine.high %v361, %v361
    %v370 = vcombine.high %v368, %v368
    %vm387 = vcmask 58368
    %v388 = vsel %vm387, %v310, -inf
    %v389 = vrot.slane %v388, 4
    %v390 = vmax.f32 %v388, %v389
    %v391 = vrot.slane %v390, 2
    %v392 = vmax.f32 %v390, %v391
    %v393 = vrot.slane %v392, 1
    %v394 = vmax.f32 %v392, %v393
    %v395 = vsel %vm387, %v318, -inf
    %v396 = vrot.slane %v395, 4
    %v397 = vmax.f32 %v395, %v396
    %v398 = vrot.slane %v397, 2
    %v399 = vmax.f32 %v397, %v398
    %v400 = vrot.slane %v399, 1
    %v401 = vmax.f32 %v399, %v400
    %v402 = vsel %vm387, %v317, -inf
    %v403 = vrot.slane %v402, 4
    %v404 = vmax.f32 %v402, %v403
    %v405 = vrot.slane %v404, 2
    %v406 = vmax.f32 %v404, %v405
    %v407 = vrot.slane %v406, 1
    %v408 = vmax.f32 %v406, %v407
    %v409 = vsel %vm387, %v319, -inf
    %v410 = vrot.slane %v409, 4
    %v411 = vmax.f32 %v409, %v410
    %v412 = vrot.slane %v411, 2
    %v413 = vmax.f32 %v411, %v412
    %v414 = vrot.slane %v413, 1
    %v415 = vmax.f32 %v413, %v414
    %v416 = vsel %vm387, %v327, -inf
    %v417 = vrot.slane %v416, 4
    %v418 = vmax.f32 %v416, %v417
    %v419 = vrot.slane %v418, 2
    %v420 = vmax.f32 %v418, %v419
    %v421 = vrot.slane %v420, 1
    %v422 = vmax.f32 %v420, %v421
    %v423 = vsel %vm387, %v335, -inf
    %v424 = vrot.slane %v423, 4
    %v425 = vmax.f32 %v423, %v424
    %v426 = vrot.slane %v425, 2
    %v427 = vmax.f32 %v425, %v426
    %v428 = vrot.slane %v427, 1
    %v429 = vmax.f32 %v427, %v428
    %v430 = vsel %vm387, %v334, -inf
    %v431 = vrot.slane %v430, 4
    %v432 = vmax.f32 %v430, %v431
    %v433 = vrot.slane %v432, 2
    %v434 = vmax.f32 %v432, %v433
    %v435 = vrot.slane %v434, 1
    %v436 = vmax.f32 %v434, %v435
    %v437 = vsel %vm387, %v336, -inf
    %v438 = vrot.slane %v437, 4
    %v439 = vmax.f32 %v437, %v438
    %v440 = vrot.slane %v439, 2
    %v441 = vmax.f32 %v439, %v440
    %v442 = vrot.slane %v441, 1
    %v443 = vmax.f32 %v441, %v442
    %v444 = vsel %vm387, %v344, -inf
    %v445 = vrot.slane %v444, 4
    %v446 = vmax.f32 %v444, %v445
    %v447 = vrot.slane %v446, 2
    %v448 = vmax.f32 %v446, %v447
    %v449 = vrot.slane %v448, 1
    %v450 = vmax.f32 %v448, %v449
    %v451 = vsel %vm387, %v352, -inf
    %v452 = vrot.slane %v451, 4
    %v453 = vmax.f32 %v451, %v452
    %v454 = vrot.slane %v453, 2
    %v455 = vmax.f32 %v453, %v454
    %v456 = vrot.slane %v455, 1
    %v457 = vmax.f32 %v455, %v456
    %v458 = vsel %vm387, %v351, -inf
    %v459 = vrot.slane %v458, 4
    %v460 = vmax.f32 %v458, %v459
    %v461 = vrot.slane %v460, 2
    %v462 = vmax.f32 %v460, %v461
    %v463 = vrot.slane %v462, 1
    %v464 = vmax.f32 %v462, %v463
    %v465 = vsel %vm387, %v353, -inf
    %v466 = vrot.slane %v465, 4
    %v467 = vmax.f32 %v465, %v466
    %v468 = vrot.slane %v467, 2
    %v469 = vmax.f32 %v467, %v468
    %v470 = vrot.slane %v469, 1
    %v471 = vmax.f32 %v469, %v470
    %v472 = vsel %vm387, %v361, -inf
    %v473 = vrot.slane %v472, 4
    %v474 = vmax.f32 %v472, %v473
    %v475 = vrot.slane %v474, 2
    %v476 = vmax.f32 %v474, %v475
    %v477 = vrot.slane %v476, 1
    %v478 = vmax.f32 %v476, %v477
    %v479 = vsel %vm387, %v369, -inf
    %v480 = vrot.slane %v479, 4
    %v481 = vmax.f32 %v479, %v480
    %v482 = vrot.slane %v481, 2
    %v483 = vmax.f32 %v481, %v482
    %v484 = vrot.slane %v483, 1
    %v485 = vmax.f32 %v483, %v484
    %v486 = vsel %vm387, %v368, -inf
    %v487 = vrot.slane %v486, 4
    %v488 = vmax.f32 %v486, %v487
    %v489 = vrot.slane %v488, 2
    %v490 = vmax.f32 %v488, %v489
    %v491 = vrot.slane %v490, 1
    %v492 = vmax.f32 %v490, %v491
    %v493 = vsel %vm387, %v370, -inf
    %v494 = vrot.slane %v493, 4
    %v495 = vmax.f32 %v493, %v494
    %v496 = vrot.slane %v495, 2
    %v497 = vmax.f32 %v495, %v496
    %v498 = vrot.slane %v497, 1
    %v499 = vmax.f32 %v497, %v498
    %v500 = vld [vmem:[%s2] sm:$0xff]
    %v501 = vlaneseq
    %v502 = vshrl.u32 %v501, 7
    %v503 = vsub.s32 1, %v502
    %v504 = vrot.slane %v36, %v503
    %vm521 = vcmask 1041409
    %v522 = vsel %vm521, %v401, %v394
    %vm523 = vcmask 1042434
    %v524 = vsel %vm523, %v408, %v522
    %vm525 = vcmask 1043459
    %v526 = vsel %vm525, %v415, %v524
    %vm527 = vcmask 1044484
    %v528 = vsel %vm527, %v422, %v526
    %vm529 = vcmask 1045509
    %v530 = vsel %vm529, %v429, %v528
    %vm531 = vcmask 1046534
    %v532 = vsel %vm531, %v436, %v530
    %vm533 = vcmask 1047559
    %v534 = vsel %vm533, %v443, %v532
    %v535 = vsel %vm521, %v457, %v450
    %v536 = vsel %vm523, %v464, %v535
    %v537 = vsel %vm525, %v471, %v536
    %v538 = vsel %vm527, %v478, %v537
    %v539 = vsel %vm529, %v485, %v538
    %v540 = vsel %vm531, %v492, %v539
    %v541 = vsel %vm533, %v499, %v540
    %vm542 = vcmask 64512
    %v543 = vsel %vm542, %v534, 0
    %v545 = vsel %vm542, %v541, 0
    %547 = vmatprep.subr.mxu0 0.0
    %548 = vmatpush1.msra.mxu0 %v500
    %549 = vmatprep.subr.mxu0 0.0
    %550 = vmatpush1.msra.mxu0 0.0
    %551 = vmatprep.subr.mxu0 0.0
    %552 = vmatpush1.msra.mxu0 0.0
    %553 = vmatprep.subr.mxu0 0.0
    %554 = vmatpush1.msra.mxu0 0.0
    %555 = vmatprep.subr.mxu0 0.0
    %556 = vmatpush1.msra.mxu0 0.0
    %557 = vmatprep.subr.mxu0 0.0
    %558 = vmatpush1.msra.mxu0 0.0
    %559 = vmatprep.subr.mxu0 0.0
    %560 = vmatpush1.msra.mxu0 0.0
    %561 = vmatprep.subr.mxu0 0.0
    %562 = vmatpush1.msra.mxu0 0.0
    %563 = vmatprep.subr.mxu0 0.0
    %564 = vmatpush1.msra.mxu0 0.0
    %565 = vmatprep.subr.mxu0 0.0
    %566 = vmatpush1.msra.mxu0 0.0
    %567 = vmatprep.subr.mxu0 0.0
    %568 = vmatpush1.msra.mxu0 0.0
    %569 = vmatprep.subr.mxu0 0.0
    %570 = vmatpush1.msra.mxu0 0.0
    %571 = vmatprep.subr.mxu0 0.0
    %572 = vmatpush1.msra.mxu0 0.0
    %573 = vmatprep.subr.mxu0 0.0
    %574 = vmatpush1.msra.mxu0 0.0
    %575 = vmatprep.subr.mxu0 0.0
    %576 = vmatpush1.msra.mxu0 0.0
    %577 = vmatprep.subr.mxu0 0.0
    %578 = vmatpush1.msra.mxu0 0.0
    %579 = vmatprep.subr.mxu0 0.0
    %580 = vmatpush1.msra.mxu0 0.0
    %581 = vmatprep.subr.mxu0 0.0
    %582 = vmatpush1.msra.mxu0 0.0
    %583 = vmatprep.subr.mxu0 0.0
    %584 = vmatpush1.msra.mxu0 0.0
    %585 = vmatprep.subr.mxu0 0.0
    %586 = vmatpush1.msra.mxu0 0.0
    %587 = vmatprep.subr.mxu0 0.0
    %588 = vmatpush1.msra.mxu0 0.0
    %589 = vmatprep.subr.mxu0 0.0
    %590 = vmatpush1.msra.mxu0 0.0
    %591 = vmatprep.subr.mxu0 0.0
    %592 = vmatpush1.msra.mxu0 0.0
    %593 = vmatprep.subr.mxu0 0.0
    %594 = vmatpush1.msra.mxu0 0.0
    %595 = vmatprep.subr.mxu0 0.0
    %596 = vmatpush1.msra.mxu0 0.0
    %597 = vmatprep.subr.mxu0 0.0
    %598 = vmatpush1.msra.mxu0 0.0
    %599 = vmatprep.subr.mxu0 0.0
    %600 = vmatpush1.msra.mxu0 0.0
    %601 = vmatprep.subr.mxu0 0.0
    %602 = vmatpush1.msra.mxu0 0.0
    %603 = vmatprep.subr.mxu0 0.0
    %604 = vmatpush1.msra.mxu0 0.0
    %605 = vmatprep.subr.mxu0 0.0
    %606 = vmatpush1.msra.mxu0 0.0
    %607 = vmatprep.subr.mxu0 0.0
    %608 = vmatpush1.msra.mxu0 0.0
    %609 = vmatprep.subr.mxu0 0.0
    %610 = vmatpush1.msra.mxu0 0.0
    %611 = vmatprep.mubr.f32.mxu0 0.0
    %612 = vmatmul.mubr.f32.gmra.mrb[0].mxu0 %v543
    %v613 = vpop.f32.mrb[0].mxu0
    %v614 = vadd.f32 %v504, %v613
    %v615 = vpop.f32.mrb[0].mxu0
    %616 = vmatprep.mubr.f32.mxu0 0.0
    %617 = vmatmul.mubr.f32.gmra.mrb[0].mxu0 %v545
    %v618 = vpop.f32.mrb[0].mxu0
    %v619 = vadd.f32 %v504, %v618
    %v620 = vpop.f32.mrb[0].mxu0
    %621 = vdwg.mxu0
    %v622 = vlaneseq
    %v623 = vand.u32 %v622, 127
    %vm624 = vcmp.lt.s32.totalorder %v623, 0
    %v625 = vsub.s32 0, %v623
    %v626 = vsel %vm624, %v625, %v623
    %v627 = vshrl.u32 %v626, 5
    %v628 = vand.u32 %v626, 31
    %v629 = vsub.s32 0, %v628
    %v630 = vsel %vm624, %v629, %v628
    %vm631 = vcmp.ne.s32.totalorder %v630, 0
    %vm632 = vcmp.lt.s32.totalorder %v630, 0
    %vm633 = vmand %vm632, %vm631
    %v634 = vadd.s32 %v630, 32
    %v635 = vsel %vm633, %v634, %v630
    %vm636 = vcmp.lt.s32.totalorder %v635, 16
    %v637 = vsel %vm636, 1, 0
    %vm638 = vcmp.eq.s32.totalorder %v637, 1
    %v639 = vsel %vm638, %v614, 0.0
    %v640 = vsel %vm638, %v619, 0.0
    %v641 = vsub.f32 %v614, %v639
    %v642 = vsub.f32 %v619, %v640
    %v645 = vrot.slane %v641, 7
    %v646 = vrot.slane %v642, 7
    %v649 = vadd.f32 %v639, %v645
    %v650 = vadd.f32 %v640, %v646
    %v651 = vrot.slane %v641, 5
    %v652 = vrot.slane %v642, 5
    %v655 = vadd.f32 %v639, %v651
    %v656 = vadd.f32 %v640, %v652
    %v657 = vrot.slane %v641, 3
    %v658 = vrot.slane %v642, 3
    %v661 = vadd.f32 %v639, %v657
    %v662 = vadd.f32 %v640, %v658
    %v663 = vrot.slane %v641, 1
    %v664 = vrot.slane %v642, 1
    %v667 = vadd.f32 %v639, %v663
    %v668 = vadd.f32 %v640, %v664
    %vm669 = vcmp.ge.s32.totalorder %v623, 64
    %vm670 = vcmp.lt.s32.totalorder %v623, 96
    %vm671 = vmand %vm669, %vm670
    %v672 = vld [vmem:[%s3] sm:$0xff]
    %v673 = vld [vmem:[%s3 + $0x8] sm:$0xff]
    %v674 = vld [vmem:[%s3 + $0x10] sm:$0xff]
    %v675 = vld [vmem:[%s3 + $0x18] sm:$0xff]
    %vm676 = vcmask 261120
    %v678 = vsel %vm676, 0.0, 0
    %680 = vmatprep.subr.mxu0 0.0
    %681 = vmatpush1.msra.mxu0 %v672
    %682 = vmatprep.subr.mxu0 0.0
    %683 = vmatpush1.msra.mxu0 %v673
    %684 = vmatprep.subr.mxu0 0.0
    %685 = vmatpush1.msra.mxu0 %v674
    %686 = vmatprep.subr.mxu0 0.0
    %687 = vmatpush1.msra.mxu0 %v675
    %688 = vmatprep.subr.mxu0 0.0
    %689 = vmatpush1.msra.mxu0 0.0
    %690 = vmatprep.subr.mxu0 0.0
    %691 = vmatpush1.msra.mxu0 0.0
    %692 = vmatprep.subr.mxu0 0.0
    %693 = vmatpush1.msra.mxu0 0.0
    %694 = vmatprep.subr.mxu0 0.0
    %695 = vmatpush1.msra.mxu0 0.0
    %696 = vmatprep.subr.mxu0 0.0
    %697 = vmatpush1.msra.mxu0 0.0
    %698 = vmatprep.subr.mxu0 0.0
    %699 = vmatpush1.msra.mxu0 0.0
    %700 = vmatprep.subr.mxu0 0.0
    %701 = vmatpush1.msra.mxu0 0.0
    %702 = vmatprep.subr.mxu0 0.0
    %703 = vmatpush1.msra.mxu0 0.0
    %704 = vmatprep.subr.mxu0 0.0
    %705 = vmatpush1.msra.mxu0 0.0
    %706 = vmatprep.subr.mxu0 0.0
    %707 = vmatpush1.msra.mxu0 0.0
    %708 = vmatprep.subr.mxu0 0.0
    %709 = vmatpush1.msra.mxu0 0.0
    %710 = vmatprep.subr.mxu0 0.0
    %711 = vmatpush1.msra.mxu0 0.0
    %712 = vmatprep.subr.mxu0 0.0
    %713 = vmatpush1.msra.mxu0 0.0
    %714 = vmatprep.subr.mxu0 0.0
    %715 = vmatpush1.msra.mxu0 0.0
    %716 = vmatprep.subr.mxu0 0.0
    %717 = vmatpush1.msra.mxu0 0.0
    %718 = vmatprep.subr.mxu0 0.0
    %719 = vmatpush1.msra.mxu0 0.0
    %720 = vmatprep.subr.mxu0 0.0
    %721 = vmatpush1.msra.mxu0 0.0
    %722 = vmatprep.subr.mxu0 0.0
    %723 = vmatpush1.msra.mxu0 0.0
    %724 = vmatprep.subr.mxu0 0.0
    %725 = vmatpush1.msra.mxu0 0.0
    %726 = vmatprep.subr.mxu0 0.0
    %727 = vmatpush1.msra.mxu0 0.0
    %728 = vmatprep.subr.mxu0 0.0
    %729 = vmatpush1.msra.mxu0 0.0
    %730 = vmatprep.subr.mxu0 0.0
    %731 = vmatpush1.msra.mxu0 0.0
    %732 = vmatprep.subr.mxu0 0.0
    %733 = vmatpush1.msra.mxu0 0.0
    %734 = vmatprep.subr.mxu0 0.0
    %735 = vmatpush1.msra.mxu0 0.0
    %736 = vmatprep.subr.mxu0 0.0
    %737 = vmatpush1.msra.mxu0 0.0
    %738 = vmatprep.subr.mxu0 0.0
    %739 = vmatpush1.msra.mxu0 0.0
    %740 = vmatprep.subr.mxu0 0.0
    %741 = vmatpush1.msra.mxu0 0.0
    %742 = vmatprep.subr.mxu0 0.0
    %743 = vmatpush1.msra.mxu0 0.0
    %744 = vmatprep.mubr.f32.mxu0 0.0
    %745 = vmatmul.mubr.f32.gmra.mrb[0].mxu0 %v678
    %v746 = vpop.f32.mrb[0].mxu0
    %v747 = vadd.f32 0.0, %v746
    %v748 = vpop.f32.mrb[0].mxu0
    %749 = vdwg.mxu0
    %v751 = vrot.slane %v747, 1
    %v754 = vadd.f32 %v649, %v747
    %v755 = vadd.f32 %v650, %v751
    %v756 = vtanh.pop %v754
    %v757 = vtanh.pop %v755
    %v758 = vxor.u32 %v754, 2147483648
    %v759 = vxor.u32 %v755, 2147483648
    %v760 = vmul.f32 %v758, 1.442695
    %v761 = vpow.pop %v760
    %v762 = vmul.f32 %v759, 1.442695
    %v763 = vpow.pop %v762
    %v764 = vadd.f32 %v761, 1.0
    %v765 = vadd.f32 %v763, 1.0
    %v766 = vrcp.pop %v764
    %v767 = vmul.f32 1.0, %v766
    %v768 = vrcp.pop %v765
    %v769 = vmul.f32 1.0, %v768
    %v772 = vrot.slane %v757, 7
    %v773 = vsel %vm521, %v772, %v756
    %v777 = vrot.slane %v769, 7
    %v778 = vsel %vm521, %v777, %v767
    %v780 = vsel %vm671, %v773, %v778
    %v781 = vmul.f32 %v780, 0.0
    %783 = vrot.lane.b32.xlu0 %v780, 64
    %v784 = vpop.permute.xlu0 %783
    %v786 = vmul.f32 %v780, %v784
    %788 = vrot.lane.b32.xlu0 %v786, 32
    %v789 = vpop.permute.xlu0 %788
    %v791 = vadd.f32 %v781, %v789
    %v792 = vtanh.pop %v791
    %794 = vrot.lane.b32.xlu0 %v792, 64
    %v795 = vpop.permute.xlu0 %794
    %v797 = vmul.f32 %v780, %v795
    %799 = vrot.lane.b32.xlu0 %v797, 32
    %v800 = vpop.permute.xlu0 %799
    %v801 = vsel %vm676, %v800, 0
    %803 = vmatprep.subr.mxu0 0.0
    %804 = vmatpush1.msra.mxu0 %v672
    %805 = vmatprep.subr.mxu0 0.0
    %806 = vmatpush1.msra.mxu0 %v673
    %807 = vmatprep.subr.mxu0 0.0
    %808 = vmatpush1.msra.mxu0 %v674
    %809 = vmatprep.subr.mxu0 0.0
    %810 = vmatpush1.msra.mxu0 %v675
    %811 = vmatprep.subr.mxu0 0.0
    %812 = vmatpush1.msra.mxu0 0.0
    %813 = vmatprep.subr.mxu0 0.0
    %814 = vmatpush1.msra.mxu0 0.0
    %815 = vmatprep.subr.mxu0 0.0
    %816 = vmatpush1.msra.mxu0 0.0
    %817 = vmatprep.subr.mxu0 0.0
    %818 = vmatpush1.msra.mxu0 0.0
    %819 = vmatprep.subr.mxu0 0.0
    %820 = vmatpush1.msra.mxu0 0.0
    %821 = vmatprep.subr.mxu0 0.0
    %822 = vmatpush1.msra.mxu0 0.0
    %823 = vmatprep.subr.mxu0 0.0
    %824 = vmatpush1.msra.mxu0 0.0
    %825 = vmatprep.subr.mxu0 0.0
    %826 = vmatpush1.msra.mxu0 0.0
    %827 = vmatprep.subr.mxu0 0.0
    %828 = vmatpush1.msra.mxu0 0.0
    %829 = vmatprep.subr.mxu0 0.0
    %830 = vmatpush1.msra.mxu0 0.0
    %831 = vmatprep.subr.mxu0 0.0
    %832 = vmatpush1.msra.mxu0 0.0
    %833 = vmatprep.subr.mxu0 0.0
    %834 = vmatpush1.msra.mxu0 0.0
    %835 = vmatprep.subr.mxu0 0.0
    %836 = vmatpush1.msra.mxu0 0.0
    %837 = vmatprep.subr.mxu0 0.0
    %838 = vmatpush1.msra.mxu0 0.0
    %839 = vmatprep.subr.mxu0 0.0
    %840 = vmatpush1.msra.mxu0 0.0
    %841 = vmatprep.subr.mxu0 0.0
    %842 = vmatpush1.msra.mxu0 0.0
    %843 = vmatprep.subr.mxu0 0.0
    %844 = vmatpush1.msra.mxu0 0.0
    %845 = vmatprep.subr.mxu0 0.0
    %846 = vmatpush1.msra.mxu0 0.0
    %847 = vmatprep.subr.mxu0 0.0
    %848 = vmatpush1.msra.mxu0 0.0
    %849 = vmatprep.subr.mxu0 0.0
    %850 = vmatpush1.msra.mxu0 0.0
    %851 = vmatprep.subr.mxu0 0.0
    %852 = vmatpush1.msra.mxu0 0.0
    %853 = vmatprep.subr.mxu0 0.0
    %854 = vmatpush1.msra.mxu0 0.0
    %855 = vmatprep.subr.mxu0 0.0
    %856 = vmatpush1.msra.mxu0 0.0
    %857 = vmatprep.subr.mxu0 0.0
    %858 = vmatpush1.msra.mxu0 0.0
    %859 = vmatprep.subr.mxu0 0.0
    %860 = vmatpush1.msra.mxu0 0.0
    %861 = vmatprep.subr.mxu0 0.0
    %862 = vmatpush1.msra.mxu0 0.0
    %863 = vmatprep.subr.mxu0 0.0
    %864 = vmatpush1.msra.mxu0 0.0
    %865 = vmatprep.subr.mxu0 0.0
    %866 = vmatpush1.msra.mxu0 0.0
    %867 = vmatprep.mubr.f32.mxu0 0.0
    %868 = vmatmul.mubr.f32.gmra.mrb[0].mxu0 %v801
    %v869 = vpop.f32.mrb[0].mxu0
    %v870 = vadd.f32 0.0, %v869
    %v871 = vpop.f32.mrb[0].mxu0
    %872 = vdwg.mxu0
    %v874 = vrot.slane %v870, 7
    %v877 = vadd.f32 %v655, %v874
    %v878 = vadd.f32 %v656, %v870
    %v879 = vtanh.pop %v877
    %v880 = vtanh.pop %v878
    %v881 = vxor.u32 %v877, 2147483648
    %v882 = vxor.u32 %v878, 2147483648
    %v883 = vmul.f32 %v881, 1.442695
    %v884 = vpow.pop %v883
    %v885 = vmul.f32 %v882, 1.442695
    %v886 = vpow.pop %v885
    %v887 = vadd.f32 %v884, 1.0
    %v888 = vadd.f32 %v886, 1.0
    %v889 = vrcp.pop %v887
    %v890 = vmul.f32 1.0, %v889
    %v891 = vrcp.pop %v888
    %v892 = vmul.f32 1.0, %v891
    %v895 = vrot.slane %v879, 1
    %v896 = vsel %vm521, %v880, %v895
    %v900 = vrot.slane %v890, 1
    %v901 = vsel %vm521, %v892, %v900
    %v903 = vsel %vm671, %v896, %v901
    %v904 = vmul.f32 %v903, %v791
    %906 = vrot.lane.b32.xlu0 %v903, 64
    %v907 = vpop.permute.xlu0 %906
    %v909 = vmul.f32 %v903, %v907
    %911 = vrot.lane.b32.xlu0 %v909, 32
    %v912 = vpop.permute.xlu0 %911
    %v914 = vadd.f32 %v904, %v912
    %v915 = vtanh.pop %v914
    %917 = vrot.lane.b32.xlu0 %v915, 64
    %v918 = vpop.permute.xlu0 %917
    %v920 = vmul.f32 %v903, %v918
    %922 = vrot.lane.b32.xlu0 %v920, 32
    %v923 = vpop.permute.xlu0 %922
    %v924 = vsel %vm676, %v923, 0
    %926 = vmatprep.subr.mxu0 0.0
    %927 = vmatpush1.msra.mxu0 %v672
    %928 = vmatprep.subr.mxu0 0.0
    %929 = vmatpush1.msra.mxu0 %v673
    %930 = vmatprep.subr.mxu0 0.0
    %931 = vmatpush1.msra.mxu0 %v674
    %932 = vmatprep.subr.mxu0 0.0
    %933 = vmatpush1.msra.mxu0 %v675
    %934 = vmatprep.subr.mxu0 0.0
    %935 = vmatpush1.msra.mxu0 0.0
    %936 = vmatprep.subr.mxu0 0.0
    %937 = vmatpush1.msra.mxu0 0.0
    %938 = vmatprep.subr.mxu0 0.0
    %939 = vmatpush1.msra.mxu0 0.0
    %940 = vmatprep.subr.mxu0 0.0
    %941 = vmatpush1.msra.mxu0 0.0
    %942 = vmatprep.subr.mxu0 0.0
    %943 = vmatpush1.msra.mxu0 0.0
    %944 = vmatprep.subr.mxu0 0.0
    %945 = vmatpush1.msra.mxu0 0.0
    %946 = vmatprep.subr.mxu0 0.0
    %947 = vmatpush1.msra.mxu0 0.0
    %948 = vmatprep.subr.mxu0 0.0
    %949 = vmatpush1.msra.mxu0 0.0
    %950 = vmatprep.subr.mxu0 0.0
    %951 = vmatpush1.msra.mxu0 0.0
    %952 = vmatprep.subr.mxu0 0.0
    %953 = vmatpush1.msra.mxu0 0.0
    %954 = vmatprep.subr.mxu0 0.0
    %955 = vmatpush1.msra.mxu0 0.0
    %956 = vmatprep.subr.mxu0 0.0
    %957 = vmatpush1.msra.mxu0 0.0
    %958 = vmatprep.subr.mxu0 0.0
    %959 = vmatpush1.msra.mxu0 0.0
    %960 = vmatprep.subr.mxu0 0.0
    %961 = vmatpush1.msra.mxu0 0.0
    %962 = vmatprep.subr.mxu0 0.0
    %963 = vmatpush1.msra.mxu0 0.0
    %964 = vmatprep.subr.mxu0 0.0
    %965 = vmatpush1.msra.mxu0 0.0
    %966 = vmatprep.subr.mxu0 0.0
    %967 = vmatpush1.msra.mxu0 0.0
    %968 = vmatprep.subr.mxu0 0.0
    %969 = vmatpush1.msra.mxu0 0.0
    %970 = vmatprep.subr.mxu0 0.0
    %971 = vmatpush1.msra.mxu0 0.0
    %972 = vmatprep.subr.mxu0 0.0
    %973 = vmatpush1.msra.mxu0 0.0
    %974 = vmatprep.subr.mxu0 0.0
    %975 = vmatpush1.msra.mxu0 0.0
    %976 = vmatprep.subr.mxu0 0.0
    %977 = vmatpush1.msra.mxu0 0.0
    %978 = vmatprep.subr.mxu0 0.0
    %979 = vmatpush1.msra.mxu0 0.0
    %980 = vmatprep.subr.mxu0 0.0
    %981 = vmatpush1.msra.mxu0 0.0
    %982 = vmatprep.subr.mxu0 0.0
    %983 = vmatpush1.msra.mxu0 0.0
    %984 = vmatprep.subr.mxu0 0.0
    %985 = vmatpush1.msra.mxu0 0.0
    %986 = vmatprep.subr.mxu0 0.0
    %987 = vmatpush1.msra.mxu0 0.0
    %988 = vmatprep.subr.mxu0 0.0
    %989 = vmatpush1.msra.mxu0 0.0
    %990 = vmatprep.mubr.f32.mxu0 0.0
    %991 = vmatmul.mubr.f32.gmra.mrb[0].mxu0 %v924
    %v992 = vpop.f32.mrb[0].mxu0
    %v993 = vadd.f32 0.0, %v992
    %v994 = vpop.f32.mrb[0].mxu0
    %995 = vdwg.mxu0
    %v997 = vrot.slane %v993, 6
    %v998 = vrot.slane %v993, 7
    %v1001 = vadd.f32 %v661, %v997
    %v1002 = vadd.f32 %v662, %v998
    %v1003 = vtanh.pop %v1001
    %v1004 = vtanh.pop %v1002
    %v1005 = vxor.u32 %v1001, 2147483648
    %v1006 = vxor.u32 %v1002, 2147483648
    %v1007 = vmul.f32 %v1005, 1.442695
    %v1008 = vpow.pop %v1007
    %v1009 = vmul.f32 %v1006, 1.442695
    %v1010 = vpow.pop %v1009
    %v1011 = vadd.f32 %v1008, 1.0
    %v1012 = vadd.f32 %v1010, 1.0
    %v1013 = vrcp.pop %v1011
    %v1014 = vmul.f32 1.0, %v1013
    %v1015 = vrcp.pop %v1012
    %v1016 = vmul.f32 1.0, %v1015
    %v1019 = vrot.slane %v1003, 2
    %v1020 = vrot.slane %v1004, 1
    %v1021 = vsel %vm521, %v1020, %v1019
    %v1025 = vrot.slane %v1014, 2
    %v1026 = vrot.slane %v1016, 1
    %v1027 = vsel %vm521, %v1026, %v1025
    %v1029 = vsel %vm671, %v1021, %v1027
    %v1030 = vmul.f32 %v1029, %v914
    %1032 = vrot.lane.b32.xlu0 %v1029, 64
    %v1033 = vpop.permute.xlu0 %1032
    %v1035 = vmul.f32 %v1029, %v1033
    %1037 = vrot.lane.b32.xlu0 %v1035, 32
    %v1038 = vpop.permute.xlu0 %1037
    %v1040 = vadd.f32 %v1030, %v1038
    %v1041 = vtanh.pop %v1040
    %1043 = vrot.lane.b32.xlu0 %v1041, 64
    %v1044 = vpop.permute.xlu0 %1043
    %v1046 = vmul.f32 %v1029, %v1044
    %1048 = vrot.lane.b32.xlu0 %v1046, 32
    %v1049 = vpop.permute.xlu0 %1048
    %v1050 = vsel %vm676, %v1049, 0
    %1052 = vmatprep.subr.mxu0 0.0
    %1053 = vmatpush1.msra.mxu0 %v672
    %1054 = vmatprep.subr.mxu0 0.0
    %1055 = vmatpush1.msra.mxu0 %v673
    %1056 = vmatprep.subr.mxu0 0.0
    %1057 = vmatpush1.msra.mxu0 %v674
    %1058 = vmatprep.subr.mxu0 0.0
    %1059 = vmatpush1.msra.mxu0 %v675
    %1060 = vmatprep.subr.mxu0 0.0
    %1061 = vmatpush1.msra.mxu0 0.0
    %1062 = vmatprep.subr.mxu0 0.0
    %1063 = vmatpush1.msra.mxu0 0.0
    %1064 = vmatprep.subr.mxu0 0.0
    %1065 = vmatpush1.msra.mxu0 0.0
    %1066 = vmatprep.subr.mxu0 0.0
    %1067 = vmatpush1.msra.mxu0 0.0
    %1068 = vmatprep.subr.mxu0 0.0
    %1069 = vmatpush1.msra.mxu0 0.0
    %1070 = vmatprep.subr.mxu0 0.0
    %1071 = vmatpush1.msra.mxu0 0.0
    %1072 = vmatprep.subr.mxu0 0.0
    %1073 = vmatpush1.msra.mxu0 0.0
    %1074 = vmatprep.subr.mxu0 0.0
    %1075 = vmatpush1.msra.mxu0 0.0
    %1076 = vmatprep.subr.mxu0 0.0
    %1077 = vmatpush1.msra.mxu0 0.0
    %1078 = vmatprep.subr.mxu0 0.0
    %1079 = vmatpush1.msra.mxu0 0.0
    %1080 = vmatprep.subr.mxu0 0.0
    %1081 = vmatpush1.msra.mxu0 0.0
    %1082 = vmatprep.subr.mxu0 0.0
    %1083 = vmatpush1.msra.mxu0 0.0
    %1084 = vmatprep.subr.mxu0 0.0
    %1085 = vmatpush1.msra.mxu0 0.0
    %1086 = vmatprep.subr.mxu0 0.0
    %1087 = vmatpush1.msra.mxu0 0.0
    %1088 = vmatprep.subr.mxu0 0.0
    %1089 = vmatpush1.msra.mxu0 0.0
    %1090 = vmatprep.subr.mxu0 0.0
    %1091 = vmatpush1.msra.mxu0 0.0
    %1092 = vmatprep.subr.mxu0 0.0
    %1093 = vmatpush1.msra.mxu0 0.0
    %1094 = vmatprep.subr.mxu0 0.0
    %1095 = vmatpush1.msra.mxu0 0.0
    %1096 = vmatprep.subr.mxu0 0.0
    %1097 = vmatpush1.msra.mxu0 0.0
    %1098 = vmatprep.subr.mxu0 0.0
    %1099 = vmatpush1.msra.mxu0 0.0
    %1100 = vmatprep.subr.mxu0 0.0
    %1101 = vmatpush1.msra.mxu0 0.0
    %1102 = vmatprep.subr.mxu0 0.0
    %1103 = vmatpush1.msra.mxu0 0.0
    %1104 = vmatprep.subr.mxu0 0.0
    %1105 = vmatpush1.msra.mxu0 0.0
    %1106 = vmatprep.subr.mxu0 0.0
    %1107 = vmatpush1.msra.mxu0 0.0
    %1108 = vmatprep.subr.mxu0 0.0
    %1109 = vmatpush1.msra.mxu0 0.0
    %1110 = vmatprep.subr.mxu0 0.0
    %1111 = vmatpush1.msra.mxu0 0.0
    %1112 = vmatprep.subr.mxu0 0.0
    %1113 = vmatpush1.msra.mxu0 0.0
    %1114 = vmatprep.subr.mxu0 0.0
    %1115 = vmatpush1.msra.mxu0 0.0
    %1116 = vmatprep.mubr.f32.mxu0 0.0
    %1117 = vmatmul.mubr.f32.gmra.mrb[0].mxu0 %v1050
    %v1118 = vpop.f32.mrb[0].mxu0
    %v1119 = vadd.f32 0.0, %v1118
    %v1120 = vpop.f32.mrb[0].mxu0
    %1121 = vdwg.mxu0
    %v1123 = vrot.slane %v1119, 5
    %v1124 = vrot.slane %v1119, 6
    %v1127 = vadd.f32 %v667, %v1123
    %v1128 = vadd.f32 %v668, %v1124
    %v1129 = vtanh.pop %v1127
    %v1130 = vtanh.pop %v1128
    %v1131 = vxor.u32 %v1127, 2147483648
    %v1132 = vxor.u32 %v1128, 2147483648
    %v1133 = vmul.f32 %v1131, 1.442695
    %v1134 = vpow.pop %v1133
    %v1135 = vmul.f32 %v1132, 1.442695
    %v1136 = vpow.pop %v1135
    %v1137 = vadd.f32 %v1134, 1.0
    %v1138 = vadd.f32 %v1136, 1.0
    %v1139 = vrcp.pop %v1137
    %v1140 = vmul.f32 1.0, %v1139
    %v1141 = vrcp.pop %v1138
    %v1142 = vmul.f32 1.0, %v1141
    %v1145 = vrot.slane %v1129, 3
    %v1146 = vrot.slane %v1130, 2
    %v1147 = vsel %vm521, %v1146, %v1145
    %v1151 = vrot.slane %v1140, 3
    %v1152 = vrot.slane %v1142, 2
    %v1153 = vsel %vm521, %v1152, %v1151
    %v1155 = vsel %vm671, %v1147, %v1153
    %v1156 = vmul.f32 %v1155, %v1040
    %1158 = vrot.lane.b32.xlu0 %v1155, 64
    %v1159 = vpop.permute.xlu0 %1158
    %v1161 = vmul.f32 %v1155, %v1159
    %1163 = vrot.lane.b32.xlu0 %v1161, 32
    %v1164 = vpop.permute.xlu0 %1163
    %v1166 = vadd.f32 %v1156, %v1164
    %v1167 = vtanh.pop %v1166
    %1169 = vrot.lane.b32.xlu0 %v1167, 64
    %v1170 = vpop.permute.xlu0 %1169
    %v1172 = vmul.f32 %v1155, %v1170
    %1174 = vrot.lane.b32.xlu0 %v1172, 32
    %v1175 = vpop.permute.xlu0 %1174
    %v1176 = vsel %vm676, %v1175, 0
    %1178 = vmatprep.subr.mxu0 0.0
    %1179 = vmatpush1.msra.mxu0 %v672
    %1180 = vmatprep.subr.mxu0 0.0
    %1181 = vmatpush1.msra.mxu0 %v673
    %1182 = vmatprep.subr.mxu0 0.0
    %1183 = vmatpush1.msra.mxu0 %v674
    %1184 = vmatprep.subr.mxu0 0.0
    %1185 = vmatpush1.msra.mxu0 %v675
    %1186 = vmatprep.subr.mxu0 0.0
    %1187 = vmatpush1.msra.mxu0 0.0
    %1188 = vmatprep.subr.mxu0 0.0
    %1189 = vmatpush1.msra.mxu0 0.0
    %1190 = vmatprep.subr.mxu0 0.0
    %1191 = vmatpush1.msra.mxu0 0.0
    %1192 = vmatprep.subr.mxu0 0.0
    %1193 = vmatpush1.msra.mxu0 0.0
    %1194 = vmatprep.subr.mxu0 0.0
    %1195 = vmatpush1.msra.mxu0 0.0
    %1196 = vmatprep.subr.mxu0 0.0
    %1197 = vmatpush1.msra.mxu0 0.0
    %1198 = vmatprep.subr.mxu0 0.0
    %1199 = vmatpush1.msra.mxu0 0.0
    %1200 = vmatprep.subr.mxu0 0.0
    %1201 = vmatpush1.msra.mxu0 0.0
    %1202 = vmatprep.subr.mxu0 0.0
    %1203 = vmatpush1.msra.mxu0 0.0
    %1204 = vmatprep.subr.mxu0 0.0
    %1205 = vmatpush1.msra.mxu0 0.0
    %1206 = vmatprep.subr.mxu0 0.0
    %1207 = vmatpush1.msra.mxu0 0.0
    %1208 = vmatprep.subr.mxu0 0.0
    %1209 = vmatpush1.msra.mxu0 0.0
    %1210 = vmatprep.subr.mxu0 0.0
    %1211 = vmatpush1.msra.mxu0 0.0
    %1212 = vmatprep.subr.mxu0 0.0
    %1213 = vmatpush1.msra.mxu0 0.0
    %1214 = vmatprep.subr.mxu0 0.0
    %1215 = vmatpush1.msra.mxu0 0.0
    %1216 = vmatprep.subr.mxu0 0.0
    %1217 = vmatpush1.msra.mxu0 0.0
    %1218 = vmatprep.subr.mxu0 0.0
    %1219 = vmatpush1.msra.mxu0 0.0
    %1220 = vmatprep.subr.mxu0 0.0
    %1221 = vmatpush1.msra.mxu0 0.0
    %1222 = vmatprep.subr.mxu0 0.0
    %1223 = vmatpush1.msra.mxu0 0.0
    %1224 = vmatprep.subr.mxu0 0.0
    %1225 = vmatpush1.msra.mxu0 0.0
    %1226 = vmatprep.subr.mxu0 0.0
    %1227 = vmatpush1.msra.mxu0 0.0
    %1228 = vmatprep.subr.mxu0 0.0
    %1229 = vmatpush1.msra.mxu0 0.0
    %1230 = vmatprep.subr.mxu0 0.0
    %1231 = vmatpush1.msra.mxu0 0.0
    %1232 = vmatprep.subr.mxu0 0.0
    %1233 = vmatpush1.msra.mxu0 0.0
    %1234 = vmatprep.subr.mxu0 0.0
    %1235 = vmatpush1.msra.mxu0 0.0
    %1236 = vmatprep.subr.mxu0 0.0
    %1237 = vmatpush1.msra.mxu0 0.0
    %1238 = vmatprep.subr.mxu0 0.0
    %1239 = vmatpush1.msra.mxu0 0.0
    %1240 = vmatprep.subr.mxu0 0.0
    %1241 = vmatpush1.msra.mxu0 0.0
    %1242 = vmatprep.mubr.f32.mxu0 0.0
    %1243 = vmatmul.mubr.f32.gmra.mrb[0].mxu0 %v1176
    %v1244 = vpop.f32.mrb[0].mxu0
    %v1245 = vadd.f32 0.0, %v1244
    %v1246 = vpop.f32.mrb[0].mxu0
    %1247 = vdwg.mxu0
    %v1249 = vrot.slane %v1245, 4
    %v1250 = vrot.slane %v1245, 5
    %v1253 = vadd.f32 %v649, %v1249
    %v1254 = vadd.f32 %v650, %v1250
    %v1255 = vtanh.pop %v1253
    %v1256 = vtanh.pop %v1254
    %v1257 = vxor.u32 %v1253, 2147483648
    %v1258 = vxor.u32 %v1254, 2147483648
    %v1259 = vmul.f32 %v1257, 1.442695
    %v1260 = vpow.pop %v1259
    %v1261 = vmul.f32 %v1258, 1.442695
    %v1262 = vpow.pop %v1261
    %v1263 = vadd.f32 %v1260, 1.0
    %v1264 = vadd.f32 %v1262, 1.0
    %v1265 = vrcp.pop %v1263
    %v1266 = vmul.f32 1.0, %v1265
    %v1267 = vrcp.pop %v1264
    %v1268 = vmul.f32 1.0, %v1267
    %v1271 = vrot.slane %v1255, 4
    %v1272 = vrot.slane %v1256, 3
    %v1273 = vsel %vm521, %v1272, %v1271
    %v1277 = vrot.slane %v1266, 4
    %v1278 = vrot.slane %v1268, 3
    %v1279 = vsel %vm521, %v1278, %v1277
    %v1281 = vsel %vm671, %v1273, %v1279
    %v1282 = vmul.f32 %v1281, %v1166
    %1284 = vrot.lane.b32.xlu0 %v1281, 64
    %v1285 = vpop.permute.xlu0 %1284
    %v1287 = vmul.f32 %v1281, %v1285
    %1289 = vrot.lane.b32.xlu0 %v1287, 32
    %v1290 = vpop.permute.xlu0 %1289
    %v1292 = vadd.f32 %v1282, %v1290
    %v1293 = vtanh.pop %v1292
    %1295 = vrot.lane.b32.xlu0 %v1293, 64
    %v1296 = vpop.permute.xlu0 %1295
    %v1298 = vmul.f32 %v1281, %v1296
    %1300 = vrot.lane.b32.xlu0 %v1298, 32
    %v1301 = vpop.permute.xlu0 %1300
    %v1302 = vsel %vm676, %v1301, 0
    %1304 = vmatprep.subr.mxu0 0.0
    %1305 = vmatpush1.msra.mxu0 %v672
    %1306 = vmatprep.subr.mxu0 0.0
    %1307 = vmatpush1.msra.mxu0 %v673
    %1308 = vmatprep.subr.mxu0 0.0
    %1309 = vmatpush1.msra.mxu0 %v674
    %1310 = vmatprep.subr.mxu0 0.0
    %1311 = vmatpush1.msra.mxu0 %v675
    %1312 = vmatprep.subr.mxu0 0.0
    %1313 = vmatpush1.msra.mxu0 0.0
    %1314 = vmatprep.subr.mxu0 0.0
    %1315 = vmatpush1.msra.mxu0 0.0
    %1316 = vmatprep.subr.mxu0 0.0
    %1317 = vmatpush1.msra.mxu0 0.0
    %1318 = vmatprep.subr.mxu0 0.0
    %1319 = vmatpush1.msra.mxu0 0.0
    %1320 = vmatprep.subr.mxu0 0.0
    %1321 = vmatpush1.msra.mxu0 0.0
    %1322 = vmatprep.subr.mxu0 0.0
    %1323 = vmatpush1.msra.mxu0 0.0
    %1324 = vmatprep.subr.mxu0 0.0
    %1325 = vmatpush1.msra.mxu0 0.0
    %1326 = vmatprep.subr.mxu0 0.0
    %1327 = vmatpush1.msra.mxu0 0.0
    %1328 = vmatprep.subr.mxu0 0.0
    %1329 = vmatpush1.msra.mxu0 0.0
    %1330 = vmatprep.subr.mxu0 0.0
    %1331 = vmatpush1.msra.mxu0 0.0
    %1332 = vmatprep.subr.mxu0 0.0
    %1333 = vmatpush1.msra.mxu0 0.0
    %1334 = vmatprep.subr.mxu0 0.0
    %1335 = vmatpush1.msra.mxu0 0.0
    %1336 = vmatprep.subr.mxu0 0.0
    %1337 = vmatpush1.msra.mxu0 0.0
    %1338 = vmatprep.subr.mxu0 0.0
    %1339 = vmatpush1.msra.mxu0 0.0
    %1340 = vmatprep.subr.mxu0 0.0
    %1341 = vmatpush1.msra.mxu0 0.0
    %1342 = vmatprep.subr.mxu0 0.0
    %1343 = vmatpush1.msra.mxu0 0.0
    %1344 = vmatprep.subr.mxu0 0.0
    %1345 = vmatpush1.msra.mxu0 0.0
    %1346 = vmatprep.subr.mxu0 0.0
    %1347 = vmatpush1.msra.mxu0 0.0
    %1348 = vmatprep.subr.mxu0 0.0
    %1349 = vmatpush1.msra.mxu0 0.0
    %1350 = vmatprep.subr.mxu0 0.0
    %1351 = vmatpush1.msra.mxu0 0.0
    %1352 = vmatprep.subr.mxu0 0.0
    %1353 = vmatpush1.msra.mxu0 0.0
    %1354 = vmatprep.subr.mxu0 0.0
    %1355 = vmatpush1.msra.mxu0 0.0
    %1356 = vmatprep.subr.mxu0 0.0
    %1357 = vmatpush1.msra.mxu0 0.0
    %1358 = vmatprep.subr.mxu0 0.0
    %1359 = vmatpush1.msra.mxu0 0.0
    %1360 = vmatprep.subr.mxu0 0.0
    %1361 = vmatpush1.msra.mxu0 0.0
    %1362 = vmatprep.subr.mxu0 0.0
    %1363 = vmatpush1.msra.mxu0 0.0
    %1364 = vmatprep.subr.mxu0 0.0
    %1365 = vmatpush1.msra.mxu0 0.0
    %1366 = vmatprep.subr.mxu0 0.0
    %1367 = vmatpush1.msra.mxu0 0.0
    %1368 = vmatprep.mubr.f32.mxu0 0.0
    %1369 = vmatmul.mubr.f32.gmra.mrb[0].mxu0 %v1302
    %v1370 = vpop.f32.mrb[0].mxu0
    %v1371 = vadd.f32 0.0, %v1370
    %v1372 = vpop.f32.mrb[0].mxu0
    %1373 = vdwg.mxu0
    %v1375 = vrot.slane %v1371, 3
    %v1376 = vrot.slane %v1371, 4
    %v1379 = vadd.f32 %v655, %v1375
    %v1380 = vadd.f32 %v656, %v1376
    %v1381 = vtanh.pop %v1379
    %v1382 = vtanh.pop %v1380
    %v1383 = vxor.u32 %v1379, 2147483648
    %v1384 = vxor.u32 %v1380, 2147483648
    %v1385 = vmul.f32 %v1383, 1.442695
    %v1386 = vpow.pop %v1385
    %v1387 = vmul.f32 %v1384, 1.442695
    %v1388 = vpow.pop %v1387
    %v1389 = vadd.f32 %v1386, 1.0
    %v1390 = vadd.f32 %v1388, 1.0
    %v1391 = vrcp.pop %v1389
    %v1392 = vmul.f32 1.0, %v1391
    %v1393 = vrcp.pop %v1390
    %v1394 = vmul.f32 1.0, %v1393
    %v1397 = vrot.slane %v1381, 5
    %v1398 = vrot.slane %v1382, 4
    %v1399 = vsel %vm521, %v1398, %v1397
    %v1403 = vrot.slane %v1392, 5
    %v1404 = vrot.slane %v1394, 4
    %v1405 = vsel %vm521, %v1404, %v1403
    %v1407 = vsel %vm671, %v1399, %v1405
    %v1408 = vmul.f32 %v1407, %v1292
    %1410 = vrot.lane.b32.xlu0 %v1407, 64
    %v1411 = vpop.permute.xlu0 %1410
    %v1413 = vmul.f32 %v1407, %v1411
    %1415 = vrot.lane.b32.xlu0 %v1413, 32
    %v1416 = vpop.permute.xlu0 %1415
    %v1418 = vadd.f32 %v1408, %v1416
    %v1419 = vtanh.pop %v1418
    %1421 = vrot.lane.b32.xlu0 %v1419, 64
    %v1422 = vpop.permute.xlu0 %1421
    %v1424 = vmul.f32 %v1407, %v1422
    %1426 = vrot.lane.b32.xlu0 %v1424, 32
    %v1427 = vpop.permute.xlu0 %1426
    %v1428 = vsel %vm676, %v1427, 0
    %1430 = vmatprep.subr.mxu0 0.0
    %1431 = vmatpush1.msra.mxu0 %v672
    %1432 = vmatprep.subr.mxu0 0.0
    %1433 = vmatpush1.msra.mxu0 %v673
    %1434 = vmatprep.subr.mxu0 0.0
    %1435 = vmatpush1.msra.mxu0 %v674
    %1436 = vmatprep.subr.mxu0 0.0
    %1437 = vmatpush1.msra.mxu0 %v675
    %1438 = vmatprep.subr.mxu0 0.0
    %1439 = vmatpush1.msra.mxu0 0.0
    %1440 = vmatprep.subr.mxu0 0.0
    %1441 = vmatpush1.msra.mxu0 0.0
    %1442 = vmatprep.subr.mxu0 0.0
    %1443 = vmatpush1.msra.mxu0 0.0
    %1444 = vmatprep.subr.mxu0 0.0
    %1445 = vmatpush1.msra.mxu0 0.0
    %1446 = vmatprep.subr.mxu0 0.0
    %1447 = vmatpush1.msra.mxu0 0.0
    %1448 = vmatprep.subr.mxu0 0.0
    %1449 = vmatpush1.msra.mxu0 0.0
    %1450 = vmatprep.subr.mxu0 0.0
    %1451 = vmatpush1.msra.mxu0 0.0
    %1452 = vmatprep.subr.mxu0 0.0
    %1453 = vmatpush1.msra.mxu0 0.0
    %1454 = vmatprep.subr.mxu0 0.0
    %1455 = vmatpush1.msra.mxu0 0.0
    %1456 = vmatprep.subr.mxu0 0.0
    %1457 = vmatpush1.msra.mxu0 0.0
    %1458 = vmatprep.subr.mxu0 0.0
    %1459 = vmatpush1.msra.mxu0 0.0
    %1460 = vmatprep.subr.mxu0 0.0
    %1461 = vmatpush1.msra.mxu0 0.0
    %1462 = vmatprep.subr.mxu0 0.0
    %1463 = vmatpush1.msra.mxu0 0.0
    %1464 = vmatprep.subr.mxu0 0.0
    %1465 = vmatpush1.msra.mxu0 0.0
    %1466 = vmatprep.subr.mxu0 0.0
    %1467 = vmatpush1.msra.mxu0 0.0
    %1468 = vmatprep.subr.mxu0 0.0
    %1469 = vmatpush1.msra.mxu0 0.0
    %1470 = vmatprep.subr.mxu0 0.0
    %1471 = vmatpush1.msra.mxu0 0.0
    %1472 = vmatprep.subr.mxu0 0.0
    %1473 = vmatpush1.msra.mxu0 0.0
    %1474 = vmatprep.subr.mxu0 0.0
    %1475 = vmatpush1.msra.mxu0 0.0
    %1476 = vmatprep.subr.mxu0 0.0
    %1477 = vmatpush1.msra.mxu0 0.0
    %1478 = vmatprep.subr.mxu0 0.0
    %1479 = vmatpush1.msra.mxu0 0.0
    %1480 = vmatprep.subr.mxu0 0.0
    %1481 = vmatpush1.msra.mxu0 0.0
    %1482 = vmatprep.subr.mxu0 0.0
    %1483 = vmatpush1.msra.mxu0 0.0
    %1484 = vmatprep.subr.mxu0 0.0
    %1485 = vmatpush1.msra.mxu0 0.0
    %1486 = vmatprep.subr.mxu0 0.0
    %1487 = vmatpush1.msra.mxu0 0.0
    %1488 = vmatprep.subr.mxu0 0.0
    %1489 = vmatpush1.msra.mxu0 0.0
    %1490 = vmatprep.subr.mxu0 0.0
    %1491 = vmatpush1.msra.mxu0 0.0
    %1492 = vmatprep.subr.mxu0 0.0
    %1493 = vmatpush1.msra.mxu0 0.0
    %1494 = vmatprep.mubr.f32.mxu0 0.0
    %1495 = vmatmul.mubr.f32.gmra.mrb[0].mxu0 %v1428
    %v1496 = vpop.f32.mrb[0].mxu0
    %v1497 = vadd.f32 0.0, %v1496
    %v1498 = vpop.f32.mrb[0].mxu0
    %1499 = vdwg.mxu0
    %v1501 = vrot.slane %v1497, 2
    %v1502 = vrot.slane %v1497, 3
    %v1505 = vadd.f32 %v661, %v1501
    %v1506 = vadd.f32 %v662, %v1502
    %v1507 = vtanh.pop %v1505
    %v1508 = vtanh.pop %v1506
    %v1509 = vxor.u32 %v1505, 2147483648
    %v1510 = vxor.u32 %v1506, 2147483648
    %v1511 = vmul.f32 %v1509, 1.442695
    %v1512 = vpow.pop %v1511
    %v1513 = vmul.f32 %v1510, 1.442695
    %v1514 = vpow.pop %v1513
    %v1515 = vadd.f32 %v1512, 1.0
    %v1516 = vadd.f32 %v1514, 1.0
    %v1517 = vrcp.pop %v1515
    %v1518 = vmul.f32 1.0, %v1517
    %v1519 = vrcp.pop %v1516
    %v1520 = vmul.f32 1.0, %v1519
    %v1523 = vrot.slane %v1507, 6
    %v1524 = vrot.slane %v1508, 5
    %v1525 = vsel %vm521, %v1524, %v1523
    %v1529 = vrot.slane %v1518, 6
    %v1530 = vrot.slane %v1520, 5
    %v1531 = vsel %vm521, %v1530, %v1529
    %v1533 = vsel %vm671, %v1525, %v1531
    %v1534 = vmul.f32 %v1533, %v1418
    %1536 = vrot.lane.b32.xlu0 %v1533, 64
    %v1537 = vpop.permute.xlu0 %1536
    %v1539 = vmul.f32 %v1533, %v1537
    %1541 = vrot.lane.b32.xlu0 %v1539, 32
    %v1542 = vpop.permute.xlu0 %1541
    %v1544 = vadd.f32 %v1534, %v1542
    %v1545 = vtanh.pop %v1544
    %1547 = vrot.lane.b32.xlu0 %v1545, 64
    %v1548 = vpop.permute.xlu0 %1547
    %v1550 = vmul.f32 %v1533, %v1548
    %1552 = vrot.lane.b32.xlu0 %v1550, 32
    %v1553 = vpop.permute.xlu0 %1552
    %v1554 = vsel %vm676, %v1553, 0
    %1556 = vmatprep.subr.mxu0 0.0
    %1557 = vmatpush1.msra.mxu0 %v672
    %1558 = vmatprep.subr.mxu0 0.0
    %1559 = vmatpush1.msra.mxu0 %v673
    %1560 = vmatprep.subr.mxu0 0.0
    %1561 = vmatpush1.msra.mxu0 %v674
    %1562 = vmatprep.subr.mxu0 0.0
    %1563 = vmatpush1.msra.mxu0 %v675
    %1564 = vmatprep.subr.mxu0 0.0
    %1565 = vmatpush1.msra.mxu0 0.0
    %1566 = vmatprep.subr.mxu0 0.0
    %1567 = vmatpush1.msra.mxu0 0.0
    %1568 = vmatprep.subr.mxu0 0.0
    %1569 = vmatpush1.msra.mxu0 0.0
    %1570 = vmatprep.subr.mxu0 0.0
    %1571 = vmatpush1.msra.mxu0 0.0
    %1572 = vmatprep.subr.mxu0 0.0
    %1573 = vmatpush1.msra.mxu0 0.0
    %1574 = vmatprep.subr.mxu0 0.0
    %1575 = vmatpush1.msra.mxu0 0.0
    %1576 = vmatprep.subr.mxu0 0.0
    %1577 = vmatpush1.msra.mxu0 0.0
    %1578 = vmatprep.subr.mxu0 0.0
    %1579 = vmatpush1.msra.mxu0 0.0
    %1580 = vmatprep.subr.mxu0 0.0
    %1581 = vmatpush1.msra.mxu0 0.0
    %1582 = vmatprep.subr.mxu0 0.0
    %1583 = vmatpush1.msra.mxu0 0.0
    %1584 = vmatprep.subr.mxu0 0.0
    %1585 = vmatpush1.msra.mxu0 0.0
    %1586 = vmatprep.subr.mxu0 0.0
    %1587 = vmatpush1.msra.mxu0 0.0
    %1588 = vmatprep.subr.mxu0 0.0
    %1589 = vmatpush1.msra.mxu0 0.0
    %1590 = vmatprep.subr.mxu0 0.0
    %1591 = vmatpush1.msra.mxu0 0.0
    %1592 = vmatprep.subr.mxu0 0.0
    %1593 = vmatpush1.msra.mxu0 0.0
    %1594 = vmatprep.subr.mxu0 0.0
    %1595 = vmatpush1.msra.mxu0 0.0
    %1596 = vmatprep.subr.mxu0 0.0
    %1597 = vmatpush1.msra.mxu0 0.0
    %1598 = vmatprep.subr.mxu0 0.0
    %1599 = vmatpush1.msra.mxu0 0.0
    %1600 = vmatprep.subr.mxu0 0.0
    %1601 = vmatpush1.msra.mxu0 0.0
    %1602 = vmatprep.subr.mxu0 0.0
    %1603 = vmatpush1.msra.mxu0 0.0
    %1604 = vmatprep.subr.mxu0 0.0
    %1605 = vmatpush1.msra.mxu0 0.0
    %1606 = vmatprep.subr.mxu0 0.0
    %1607 = vmatpush1.msra.mxu0 0.0
    %1608 = vmatprep.subr.mxu0 0.0
    %1609 = vmatpush1.msra.mxu0 0.0
    %1610 = vmatprep.subr.mxu0 0.0
    %1611 = vmatpush1.msra.mxu0 0.0
    %1612 = vmatprep.subr.mxu0 0.0
    %1613 = vmatpush1.msra.mxu0 0.0
    %1614 = vmatprep.subr.mxu0 0.0
    %1615 = vmatpush1.msra.mxu0 0.0
    %1616 = vmatprep.subr.mxu0 0.0
    %1617 = vmatpush1.msra.mxu0 0.0
    %1618 = vmatprep.subr.mxu0 0.0
    %1619 = vmatpush1.msra.mxu0 0.0
    %1620 = vmatprep.mubr.f32.mxu0 0.0
    %1621 = vmatmul.mubr.f32.gmra.mrb[0].mxu0 %v1554
    %v1622 = vpop.f32.mrb[0].mxu0
    %v1623 = vadd.f32 0.0, %v1622
    %v1624 = vpop.f32.mrb[0].mxu0
    %1625 = vdwg.mxu0
    %v1627 = vrot.slane %v1623, 1
    %v1628 = vrot.slane %v1623, 2
    %v1631 = vadd.f32 %v667, %v1627
    %v1632 = vadd.f32 %v668, %v1628
    %v1633 = vtanh.pop %v1631
    %v1634 = vtanh.pop %v1632
    %v1635 = vxor.u32 %v1631, 2147483648
    %v1636 = vxor.u32 %v1632, 2147483648
    %v1637 = vmul.f32 %v1635, 1.442695
    %v1638 = vpow.pop %v1637
    %v1639 = vmul.f32 %v1636, 1.442695
    %v1640 = vpow.pop %v1639
    %v1641 = vadd.f32 %v1638, 1.0
    %v1642 = vadd.f32 %v1640, 1.0
    %v1643 = vrcp.pop %v1641
    %v1644 = vmul.f32 1.0, %v1643
    %v1645 = vrcp.pop %v1642
    %v1646 = vmul.f32 1.0, %v1645
    %v1649 = vrot.slane %v1633, 7
    %v1650 = vrot.slane %v1634, 6
    %v1651 = vsel %vm521, %v1650, %v1649
    %v1655 = vrot.slane %v1644, 7
    %v1656 = vrot.slane %v1646, 6
    %v1657 = vsel %vm521, %v1656, %v1655
    %v1659 = vsel %vm671, %v1651, %v1657
    %v1660 = vmul.f32 %v1659, %v1544
    %1662 = vrot.lane.b32.xlu0 %v1659, 64
    %v1663 = vpop.permute.xlu0 %1662
    %v1665 = vmul.f32 %v1659, %v1663
    %1667 = vrot.lane.b32.xlu0 %v1665, 32
    %v1668 = vpop.permute.xlu0 %1667
    %v1670 = vadd.f32 %v1660, %v1668
    %v1671 = vtanh.pop %v1670
    %1673 = vrot.lane.b32.xlu0 %v1671, 64
    %v1674 = vpop.permute.xlu0 %1673
    %v1676 = vmul.f32 %v1659, %v1674
    %1679 = vrot.lane.b32.xlu0 %v1676, 32
    %v1680 = vpop.permute.xlu0 %1679
    %vm1682 = vcmask 130048
    %v1683 = vsel %vm1682, %v800, %v1680
    %v1686 = vsel %vm1682, %v923, %v1553
    %v1689 = vsel %vm1682, %v1049, %v1427
    %v1692 = vsel %vm1682, %v1175, %v1301
    %v1693 = vsel %vm1682, %v1301, %v1175
    %v1694 = vsel %vm1682, %v1427, %v1049
    %v1695 = vsel %vm1682, %v1553, %v923
    %v1696 = vsel %vm1682, %v1680, %v800
    %v1699 = vunpack.c.l.s4 1966171168
    %v1700 = vunpack.c.0.s8 %v1699
    %v1701 = vlaneseq
    %v1702 = vshrl.u32 %v1701, 7
    %v1703 = vsub.s32 %v1700, %v1702
    %v1704 = vrot.slane %v1683, %v1703
    %v1705 = vcombine.high %v1704, %v1704
    %v1707 = vunpack.c.l.s4 1966171168
    %v1708 = vunpack.c.0.s8 %v1707
    %v1709 = vlaneseq
    %v1710 = vshrl.u32 %v1709, 7
    %v1711 = vsub.s32 %v1708, %v1710
    %v1712 = vrot.slane %v1704, %v1711
    %v1714 = vunpack.c.l.s4 1966171168
    %v1715 = vunpack.c.0.s8 %v1714
    %v1716 = vlaneseq
    %v1717 = vshrl.u32 %v1716, 7
    %v1718 = vsub.s32 %v1715, %v1717
    %v1719 = vrot.slane %v1705, %v1718
    %v1724 = vunpack.c.l.s4 1966171168
    %v1725 = vunpack.c.0.s8 %v1724
    %v1726 = vlaneseq
    %v1727 = vshrl.u32 %v1726, 7
    %v1728 = vsub.s32 %v1725, %v1727
    %v1729 = vrot.slane %v1686, %v1728
    %v1730 = vcombine.high %v1729, %v1729
    %v1732 = vunpack.c.l.s4 1966171168
    %v1733 = vunpack.c.0.s8 %v1732
    %v1734 = vlaneseq
    %v1735 = vshrl.u32 %v1734, 7
    %v1736 = vsub.s32 %v1733, %v1735
    %v1737 = vrot.slane %v1729, %v1736
    %v1739 = vunpack.c.l.s4 1966171168
    %v1740 = vunpack.c.0.s8 %v1739
    %v1741 = vlaneseq
    %v1742 = vshrl.u32 %v1741, 7
    %v1743 = vsub.s32 %v1740, %v1742
    %v1744 = vrot.slane %v1730, %v1743
    %v1747 = vunpack.c.l.s4 1966171168
    %v1748 = vunpack.c.0.s8 %v1747
    %v1749 = vlaneseq
    %v1750 = vshrl.u32 %v1749, 7
    %v1751 = vsub.s32 %v1748, %v1750
    %v1752 = vrot.slane %v1689, %v1751
    %v1753 = vcombine.high %v1752, %v1752
    %v1755 = vunpack.c.l.s4 1966171168
    %v1756 = vunpack.c.0.s8 %v1755
    %v1757 = vlaneseq
    %v1758 = vshrl.u32 %v1757, 7
    %v1759 = vsub.s32 %v1756, %v1758
    %v1760 = vrot.slane %v1752, %v1759
    %v1762 = vunpack.c.l.s4 1966171168
    %v1763 = vunpack.c.0.s8 %v1762
    %v1764 = vlaneseq
    %v1765 = vshrl.u32 %v1764, 7
    %v1766 = vsub.s32 %v1763, %v1765
    %v1767 = vrot.slane %v1753, %v1766
    %v1770 = vunpack.c.l.s4 1966171168
    %v1771 = vunpack.c.0.s8 %v1770
    %v1772 = vlaneseq
    %v1773 = vshrl.u32 %v1772, 7
    %v1774 = vsub.s32 %v1771, %v1773
    %v1775 = vrot.slane %v1692, %v1774
    %v1776 = vcombine.high %v1775, %v1775
    %v1778 = vunpack.c.l.s4 1966171168
    %v1779 = vunpack.c.0.s8 %v1778
    %v1780 = vlaneseq
    %v1781 = vshrl.u32 %v1780, 7
    %v1782 = vsub.s32 %v1779, %v1781
    %v1783 = vrot.slane %v1775, %v1782
    %v1785 = vunpack.c.l.s4 1966171168
    %v1786 = vunpack.c.0.s8 %v1785
    %v1787 = vlaneseq
    %v1788 = vshrl.u32 %v1787, 7
    %v1789 = vsub.s32 %v1786, %v1788
    %v1790 = vrot.slane %v1776, %v1789
    %v1793 = vunpack.c.l.s4 1966171168
    %v1794 = vunpack.c.0.s8 %v1793
    %v1795 = vlaneseq
    %v1796 = vshrl.u32 %v1795, 7
    %v1797 = vsub.s32 %v1794, %v1796
    %v1798 = vrot.slane %v1693, %v1797
    %v1799 = vcombine.high %v1798, %v1798
    %v1801 = vunpack.c.l.s4 1966171168
    %v1802 = vunpack.c.0.s8 %v1801
    %v1803 = vlaneseq
    %v1804 = vshrl.u32 %v1803, 7
    %v1805 = vsub.s32 %v1802, %v1804
    %v1806 = vrot.slane %v1798, %v1805
    %v1808 = vunpack.c.l.s4 1966171168
    %v1809 = vunpack.c.0.s8 %v1808
    %v1810 = vlaneseq
    %v1811 = vshrl.u32 %v1810, 7
    %v1812 = vsub.s32 %v1809, %v1811
    %v1813 = vrot.slane %v1799, %v1812
    %v1816 = vunpack.c.l.s4 1966171168
    %v1817 = vunpack.c.0.s8 %v1816
    %v1818 = vlaneseq
    %v1819 = vshrl.u32 %v1818, 7
    %v1820 = vsub.s32 %v1817, %v1819
    %v1821 = vrot.slane %v1694, %v1820
    %v1822 = vcombine.high %v1821, %v1821
    %v1824 = vunpack.c.l.s4 1966171168
    %v1825 = vunpack.c.0.s8 %v1824
    %v1826 = vlaneseq
    %v1827 = vshrl.u32 %v1826, 7
    %v1828 = vsub.s32 %v1825, %v1827
    %v1829 = vrot.slane %v1821, %v1828
    %v1831 = vunpack.c.l.s4 1966171168
    %v1832 = vunpack.c.0.s8 %v1831
    %v1833 = vlaneseq
    %v1834 = vshrl.u32 %v1833, 7
    %v1835 = vsub.s32 %v1832, %v1834
    %v1836 = vrot.slane %v1822, %v1835
    %v1839 = vunpack.c.l.s4 1966171168
    %v1840 = vunpack.c.0.s8 %v1839
    %v1841 = vlaneseq
    %v1842 = vshrl.u32 %v1841, 7
    %v1843 = vsub.s32 %v1840, %v1842
    %v1844 = vrot.slane %v1695, %v1843
    %v1845 = vcombine.high %v1844, %v1844
    %v1847 = vunpack.c.l.s4 1966171168
    %v1848 = vunpack.c.0.s8 %v1847
    %v1849 = vlaneseq
    %v1850 = vshrl.u32 %v1849, 7
    %v1851 = vsub.s32 %v1848, %v1850
    %v1852 = vrot.slane %v1844, %v1851
    %v1854 = vunpack.c.l.s4 1966171168
    %v1855 = vunpack.c.0.s8 %v1854
    %v1856 = vlaneseq
    %v1857 = vshrl.u32 %v1856, 7
    %v1858 = vsub.s32 %v1855, %v1857
    %v1859 = vrot.slane %v1845, %v1858
    %v1862 = vunpack.c.l.s4 1966171168
    %v1863 = vunpack.c.0.s8 %v1862
    %v1864 = vlaneseq
    %v1865 = vshrl.u32 %v1864, 7
    %v1866 = vsub.s32 %v1863, %v1865
    %v1867 = vrot.slane %v1696, %v1866
    %v1868 = vcombine.high %v1867, %v1867
    %v1870 = vunpack.c.l.s4 1966171168
    %v1871 = vunpack.c.0.s8 %v1870
    %v1872 = vlaneseq
    %v1873 = vshrl.u32 %v1872, 7
    %v1874 = vsub.s32 %v1871, %v1873
    %v1875 = vrot.slane %v1867, %v1874
    %v1877 = vunpack.c.l.s4 1966171168
    %v1878 = vunpack.c.0.s8 %v1877
    %v1879 = vlaneseq
    %v1880 = vshrl.u32 %v1879, 7
    %v1881 = vsub.s32 %v1878, %v1880
    %v1882 = vrot.slane %v1868, %v1881
    %v1883 = vlaneseq
    %v1884 = vshrl.u32 %v1883, 7
    %v1885 = vsub.s32 0, %v1884
    %v1886 = vrot.slane %v1737, %v1885
    %v1887 = vlaneseq
    %v1888 = vshrl.u32 %v1887, 7
    %v1889 = vsub.s32 0, %v1888
    %v1890 = vrot.slane %v1744, %v1889
    %v1893 = vlaneseq
    %v1894 = vshrl.u32 %v1893, 7
    %v1895 = vsub.s32 0, %v1894
    %v1896 = vrot.slane %v1760, %v1895
    %v1897 = vlaneseq
    %v1898 = vshrl.u32 %v1897, 7
    %v1899 = vsub.s32 0, %v1898
    %v1900 = vrot.slane %v1767, %v1899
    %v1903 = vlaneseq
    %v1904 = vshrl.u32 %v1903, 7
    %v1905 = vsub.s32 0, %v1904
    %v1906 = vrot.slane %v1783, %v1905
    %v1907 = vlaneseq
    %v1908 = vshrl.u32 %v1907, 7
    %v1909 = vsub.s32 0, %v1908
    %v1910 = vrot.slane %v1790, %v1909
    %v1913 = vlaneseq
    %v1914 = vshrl.u32 %v1913, 7
    %v1915 = vsub.s32 0, %v1914
    %v1916 = vrot.slane %v1806, %v1915
    %v1917 = vlaneseq
    %v1918 = vshrl.u32 %v1917, 7
    %v1919 = vsub.s32 0, %v1918
    %v1920 = vrot.slane %v1813, %v1919
    %v1923 = vlaneseq
    %v1924 = vshrl.u32 %v1923, 7
    %v1925 = vsub.s32 0, %v1924
    %v1926 = vrot.slane %v1829, %v1925
    %v1927 = vlaneseq
    %v1928 = vshrl.u32 %v1927, 7
    %v1929 = vsub.s32 0, %v1928
    %v1930 = vrot.slane %v1836, %v1929
    %v1933 = vlaneseq
    %v1934 = vshrl.u32 %v1933, 7
    %v1935 = vsub.s32 0, %v1934
    %v1936 = vrot.slane %v1852, %v1935
    %v1937 = vlaneseq
    %v1938 = vshrl.u32 %v1937, 7
    %v1939 = vsub.s32 0, %v1938
    %v1940 = vrot.slane %v1859, %v1939
    %v1943 = vlaneseq
    %v1944 = vshrl.u32 %v1943, 7
    %v1945 = vsub.s32 0, %v1944
    %v1946 = vrot.slane %v1875, %v1945
    %v1947 = vlaneseq
    %v1948 = vshrl.u32 %v1947, 7
    %v1949 = vsub.s32 0, %v1948
    %v1950 = vrot.slane %v1882, %v1949
    %vm1953 = vcmask 1040384
    %v1954 = vsel %vm1953, %v1712, %v1886
    %v1955 = vsel %vm1953, %v1719, %v1890
    %vm1956 = vcmask 1041408
    %v1957 = vsel %vm1956, %v1954, %v1896
    %v1958 = vsel %vm1956, %v1955, %v1900
    %vm1959 = vcmask 1042432
    %v1960 = vsel %vm1959, %v1957, %v1906
    %v1961 = vsel %vm1959, %v1958, %v1910
    %v1962 = vsel %vm118, %v1960, %v1916
    %v1963 = vsel %vm118, %v1961, %v1920
    %v1964 = vsel %vm95, %v1962, %v1926
    %v1965 = vsel %vm95, %v1963, %v1930
    %v1966 = vsel %vm72, %v1964, %v1936
    %v1967 = vsel %vm72, %v1965, %v1940
    %v1968 = vsel %vm49, %v1966, %v1946
    %v1969 = vsel %vm49, %v1967, %v1950
    %v1970 = vrot.slane %v1676, 1
    %1971 = vrot.lane.b32.xlu0 %v1970, 48
    %v1972 = vpop.permute.xlu0 %1971
    %v1974 = vsel %vm1682, %v1680, %v1972
    %1975 = vrot.lane.b32.xlu0 %v1676, 16
    %v1976 = vpop.permute.xlu0 %1975
    %1978 = vrot.lane.b32.xlu0 %v1970, 32
    %v1979 = vpop.permute.xlu0 %1978
    %v1981 = vsel %vm1682, %v1976, %v1979
    %v1983 = vrot.slane %v1981, 7
    %v1985 = vsel %vm1953, %v1974, %v1983
    %v1986 = vld [vmem:[%s4] sm:$0xff]
    %v1987 = vld [vmem:[%s4 + $0x8] sm:$0xff]
    %v1988 = vld [vmem:[%s4 + $0x10] sm:$0xff]
    %v1989 = vld [vmem:[%s4 + $0x18] sm:$0xff]
    %v1990 = vlaneseq
    %v1991 = vshrl.u32 %v1990, 7
    %v1992 = vsub.s32 2, %v1991
    %v1993 = vrot.slane %v36, %v1992
    %v1995 = vsel %vm676, %v1968, 0
    %v1998 = vsel %vm676, %v1969, 0
    %2000 = vmatprep.subr.mxu0 0.0
    %2001 = vmatpush1.msra.mxu0 %v1986
    %2002 = vmatprep.subr.mxu0 0.0
    %2003 = vmatpush1.msra.mxu0 %v1987
    %2004 = vmatprep.subr.mxu0 0.0
    %2005 = vmatpush1.msra.mxu0 %v1988
    %2006 = vmatprep.subr.mxu0 0.0
    %2007 = vmatpush1.msra.mxu0 %v1989
    %2008 = vmatprep.subr.mxu0 0.0
    %2009 = vmatpush1.msra.mxu0 0.0
    %2010 = vmatprep.subr.mxu0 0.0
    %2011 = vmatpush1.msra.mxu0 0.0
    %2012 = vmatprep.subr.mxu0 0.0
    %2013 = vmatpush1.msra.mxu0 0.0
    %2014 = vmatprep.subr.mxu0 0.0
    %2015 = vmatpush1.msra.mxu0 0.0
    %2016 = vmatprep.subr.mxu0 0.0
    %2017 = vmatpush1.msra.mxu0 0.0
    %2018 = vmatprep.subr.mxu0 0.0
    %2019 = vmatpush1.msra.mxu0 0.0
    %2020 = vmatprep.subr.mxu0 0.0
    %2021 = vmatpush1.msra.mxu0 0.0
    %2022 = vmatprep.subr.mxu0 0.0
    %2023 = vmatpush1.msra.mxu0 0.0
    %2024 = vmatprep.subr.mxu0 0.0
    %2025 = vmatpush1.msra.mxu0 0.0
    %2026 = vmatprep.subr.mxu0 0.0
    %2027 = vmatpush1.msra.mxu0 0.0
    %2028 = vmatprep.subr.mxu0 0.0
    %2029 = vmatpush1.msra.mxu0 0.0
    %2030 = vmatprep.subr.mxu0 0.0
    %2031 = vmatpush1.msra.mxu0 0.0
    %2032 = vmatprep.subr.mxu0 0.0
    %2033 = vmatpush1.msra.mxu0 0.0
    %2034 = vmatprep.subr.mxu0 0.0
    %2035 = vmatpush1.msra.mxu0 0.0
    %2036 = vmatprep.subr.mxu0 0.0
    %2037 = vmatpush1.msra.mxu0 0.0
    %2038 = vmatprep.subr.mxu0 0.0
    %2039 = vmatpush1.msra.mxu0 0.0
    %2040 = vmatprep.subr.mxu0 0.0
    %2041 = vmatpush1.msra.mxu0 0.0
    %2042 = vmatprep.subr.mxu0 0.0
    %2043 = vmatpush1.msra.mxu0 0.0
    %2044 = vmatprep.subr.mxu0 0.0
    %2045 = vmatpush1.msra.mxu0 0.0
    %2046 = vmatprep.subr.mxu0 0.0
    %2047 = vmatpush1.msra.mxu0 0.0
    %2048 = vmatprep.subr.mxu0 0.0
    %2049 = vmatpush1.msra.mxu0 0.0
    %2050 = vmatprep.subr.mxu0 0.0
    %2051 = vmatpush1.msra.mxu0 0.0
    %2052 = vmatprep.subr.mxu0 0.0
    %2053 = vmatpush1.msra.mxu0 0.0
    %2054 = vmatprep.subr.mxu0 0.0
    %2055 = vmatpush1.msra.mxu0 0.0
    %2056 = vmatprep.subr.mxu0 0.0
    %2057 = vmatpush1.msra.mxu0 0.0
    %2058 = vmatprep.subr.mxu0 0.0
    %2059 = vmatpush1.msra.mxu0 0.0
    %2060 = vmatprep.subr.mxu0 0.0
    %2061 = vmatpush1.msra.mxu0 0.0
    %2062 = vmatprep.subr.mxu0 0.0
    %2063 = vmatpush1.msra.mxu0 0.0
    %2064 = vmatprep.mubr.f32.mxu0 0.0
    %2065 = vmatmul.mubr.f32.gmra.mrb[0].mxu0 %v1995
    %v2066 = vpop.f32.mrb[0].mxu0
    %v2067 = vadd.f32 %v1993, %v2066
    %v2068 = vpop.f32.mrb[0].mxu0
    %2069 = vmatprep.mubr.f32.mxu0 0.0
    %2070 = vmatmul.mubr.f32.gmra.mrb[0].mxu0 %v1998
    %v2071 = vpop.f32.mrb[0].mxu0
    %v2072 = vadd.f32 %v1993, %v2071
    %v2073 = vpop.f32.mrb[0].mxu0
    %2074 = vdwg.mxu0
    %v2075 = vld [vmem:[%s5] sm:$0xff]
    %v2076 = vld [vmem:[%s5 + $0x8] sm:$0xff]
    %v2077 = vld [vmem:[%s5 + $0x10] sm:$0xff]
    %v2078 = vld [vmem:[%s5 + $0x18] sm:$0xff]
    %v2079 = vlaneseq
    %v2080 = vshrl.u32 %v2079, 7
    %v2081 = vsub.s32 3, %v2080
    %v2082 = vrot.slane %v36, %v2081
    %v2084 = vsel %vm676, %v1985, 0
    %2086 = vmatprep.subr.mxu0 0.0
    %2087 = vmatpush1.msra.mxu0 %v2075
    %2088 = vmatprep.subr.mxu0 0.0
    %2089 = vmatpush1.msra.mxu0 %v2076
    %2090 = vmatprep.subr.mxu0 0.0
    %2091 = vmatpush1.msra.mxu0 %v2077
    %2092 = vmatprep.subr.mxu0 0.0
    %2093 = vmatpush1.msra.mxu0 %v2078
    %2094 = vmatprep.subr.mxu0 0.0
    %2095 = vmatpush1.msra.mxu0 0.0
    %2096 = vmatprep.subr.mxu0 0.0
    %2097 = vmatpush1.msra.mxu0 0.0
    %2098 = vmatprep.subr.mxu0 0.0
    %2099 = vmatpush1.msra.mxu0 0.0
    %2100 = vmatprep.subr.mxu0 0.0
    %2101 = vmatpush1.msra.mxu0 0.0
    %2102 = vmatprep.subr.mxu0 0.0
    %2103 = vmatpush1.msra.mxu0 0.0
    %2104 = vmatprep.subr.mxu0 0.0
    %2105 = vmatpush1.msra.mxu0 0.0
    %2106 = vmatprep.subr.mxu0 0.0
    %2107 = vmatpush1.msra.mxu0 0.0
    %2108 = vmatprep.subr.mxu0 0.0
    %2109 = vmatpush1.msra.mxu0 0.0
    %2110 = vmatprep.subr.mxu0 0.0
    %2111 = vmatpush1.msra.mxu0 0.0
    %2112 = vmatprep.subr.mxu0 0.0
    %2113 = vmatpush1.msra.mxu0 0.0
    %2114 = vmatprep.subr.mxu0 0.0
    %2115 = vmatpush1.msra.mxu0 0.0
    %2116 = vmatprep.subr.mxu0 0.0
    %2117 = vmatpush1.msra.mxu0 0.0
    %2118 = vmatprep.subr.mxu0 0.0
    %2119 = vmatpush1.msra.mxu0 0.0
    %2120 = vmatprep.subr.mxu0 0.0
    %2121 = vmatpush1.msra.mxu0 0.0
    %2122 = vmatprep.subr.mxu0 0.0
    %2123 = vmatpush1.msra.mxu0 0.0
    %2124 = vmatprep.subr.mxu0 0.0
    %2125 = vmatpush1.msra.mxu0 0.0
    %2126 = vmatprep.subr.mxu0 0.0
    %2127 = vmatpush1.msra.mxu0 0.0
    %2128 = vmatprep.subr.mxu0 0.0
    %2129 = vmatpush1.msra.mxu0 0.0
    %2130 = vmatprep.subr.mxu0 0.0
    %2131 = vmatpush1.msra.mxu0 0.0
    %2132 = vmatprep.subr.mxu0 0.0
    %2133 = vmatpush1.msra.mxu0 0.0
    %2134 = vmatprep.subr.mxu0 0.0
    %2135 = vmatpush1.msra.mxu0 0.0
    %2136 = vmatprep.subr.mxu0 0.0
    %2137 = vmatpush1.msra.mxu0 0.0
    %2138 = vmatprep.subr.mxu0 0.0
    %2139 = vmatpush1.msra.mxu0 0.0
    %2140 = vmatprep.subr.mxu0 0.0
    %2141 = vmatpush1.msra.mxu0 0.0
    %2142 = vmatprep.subr.mxu0 0.0
    %2143 = vmatpush1.msra.mxu0 0.0
    %2144 = vmatprep.subr.mxu0 0.0
    %2145 = vmatpush1.msra.mxu0 0.0
    %2146 = vmatprep.subr.mxu0 0.0
    %2147 = vmatpush1.msra.mxu0 0.0
    %2148 = vmatprep.subr.mxu0 0.0
    %2149 = vmatpush1.msra.mxu0 0.0
    %2150 = vmatprep.mubr.f32.mxu0 0.0
    %2151 = vmatmul.mubr.f32.gmra.mrb[0].mxu0 %v2084
    %v2152 = vpop.f32.mrb[0].mxu0
    %v2153 = vadd.f32 %v2082, %v2152
    %v2154 = vpop.f32.mrb[0].mxu0
    %2155 = vdwg.mxu0
    %v2158 = vunpack.c.l.s4 1966171168
    %v2159 = vunpack.c.0.s8 %v2158
    %v2160 = vlaneseq
    %v2161 = vshrl.u32 %v2160, 7
    %v2162 = vsub.s32 %v2159, %v2161
    %v2163 = vrot.slane %v2153, %v2162
    %v2164 = vcombine.high %v2163, %v2163
    %v2166 = vunpack.c.l.s4 1966171168
    %v2167 = vunpack.c.0.s8 %v2166
    %v2168 = vlaneseq
    %v2169 = vshrl.u32 %v2168, 7
    %v2170 = vsub.s32 %v2167, %v2169
    %v2171 = vrot.slane %v2163, %v2170
    %v2173 = vunpack.c.l.s4 1966171168
    %v2174 = vunpack.c.0.s8 %v2173
    %v2175 = vlaneseq
    %v2176 = vshrl.u32 %v2175, 7
    %v2177 = vsub.s32 %v2174, %v2176
    %v2178 = vrot.slane %v2164, %v2177
    %v2179 = vlaneseq
    %v2180 = vshrl.u32 %v2179, 7
    %v2181 = vsub.s32 0, %v2180
    %v2182 = vrot.slane %v2171, %v2181
    %v2183 = vlaneseq
    %v2184 = vshrl.u32 %v2183, 7
    %v2185 = vsub.s32 0, %v2184
    %v2186 = vrot.slane %v2178, %v2185
    %v2189 = vadd.f32 %v2067, %v2182
    %v2190 = vadd.f32 %v2072, %v2186
    %v2191 = vtanh.pop %v2189
    %v2192 = vtanh.pop %v2190
    %v2193 = vlaneseq
    %v2194 = vshrl.u32 %v2193, 7
    %v2195 = vsub.s32 4, %v2194
    %v2196 = vrot.slane %v36, %v2195
    %v2197 = vmul.f32 %v2191, %v2196
    %v2198 = vmul.f32 %v2192, %v2196
    %v2199 = vsel %vm1682, %v2197, 0.0
    %2200 = vadd.xlane.f32.xlu0 %v2199
    %v2201 = vpop.xlane.xlu0 %2200
    %v2202 = vsel %vm1682, %v2198, 0.0
    %2203 = vadd.xlane.f32.xlu0 %v2202
    %v2204 = vpop.xlane.xlu0 %2203
    %v2206 = vrot.slane %v36, 5
    %s2207 = vtos %v2206
    %v2208 = vstv %s2207
    %v2210 = vadd.f32 %v2201, %v2208
    %v2211 = vadd.f32 %v2204, %v2208
    %v2214 = vlaneseq
    %v2215 = vshrl.u32 %v2214, 7
    %v2216 = vsub.s32 %v623, %v2215
    %v2217 = vrot.slane %v2210, %v2216
    %v2218 = vlaneseq
    %v2219 = vshrl.u32 %v2218, 7
    %v2220 = vsub.s32 %v623, %v2219
    %v2221 = vrot.slane %v2211, %v2220
    %v2222 = vsel %vm521, %v2221, %v2217
    %v2224 = vsel %vm387, %v2222, -inf
    %2225 = vmax.xlane.f32.xlu0 %v2224
    %v2226 = vpop.xlane.xlu0 %2225
    %v2228 = vlaneseq
    %v2229 = vshrl.u32 %v2228, 7
    %v2230 = vsub.s32 0, %v2229
    %v2231 = vrot.slane %v2226, %v2230
    %v2232 = vlaneseq
    %v2233 = vshrl.u32 %v2232, 7
    %v2234 = vsub.s32 1, %v2233
    %v2235 = vrot.slane %v2226, %v2234
    %v2238 = vsub.f32 %v2210, %v2231
    %v2239 = vsub.f32 %v2211, %v2235
    %v2240 = vmul.f32 %v2238, 1.442695
    %v2241 = vpow.pop %v2240
    %v2242 = vmul.f32 %v2239, 1.442695
    %v2243 = vpow.pop %v2242
    %2246 = vset.pattern.permute.xlu0 0
    %2247 = vperm.xlu0 %2246, %v2241
    %v2248 = vpop.permute.xlu0 %2247
    %2249 = vset.pattern.permute.xlu0 0
    %2250 = vperm.xlu0 %2249, %v2243
    %v2251 = vpop.permute.xlu0 %2250
    %v2252 = vlaneseq
    %v2253 = vshrl.u32 %v2252, 7
    %v2254 = vsub.s32 %v623, %v2253
    %v2255 = vrot.slane %v2248, %v2254
    %v2256 = vlaneseq
    %v2257 = vshrl.u32 %v2256, 7
    %v2258 = vsub.s32 %v623, %v2257
    %v2259 = vrot.slane %v2251, %v2258
    %v2260 = vsel %vm521, %v2259, %v2255
    %v2262 = vsel %vm387, %v2260, 0.0
    %2263 = vadd.xlane.f32.xlu0 %v2262
    %v2264 = vpop.xlane.xlu0 %2263
    %v2266 = vlaneseq
    %v2267 = vshrl.u32 %v2266, 7
    %v2268 = vsub.s32 0, %v2267
    %v2269 = vrot.slane %v2264, %v2268
    %v2270 = vlaneseq
    %v2271 = vshrl.u32 %v2270, 7
    %v2272 = vsub.s32 1, %v2271
    %v2273 = vrot.slane %v2264, %v2272
    %v2276 = vrcp.pop %v2269
    %v2277 = vmul.f32 %v2241, %v2276
    %v2278 = vrcp.pop %v2273
    %v2279 = vmul.f32 %v2243, %v2278
    %2282 = vset.pattern.permute.xlu0 0
    %2283 = vperm.xlu0 %2282, %v2277
    %v2284 = vpop.permute.xlu0 %2283
    %2285 = vset.pattern.permute.xlu0 0
    %2286 = vperm.xlu0 %2285, %v2279
    %v2287 = vpop.permute.xlu0 %2286
    %v2288 = vlaneseq
    %v2289 = vshrl.u32 %v2288, 7
    %v2290 = vsub.s32 %v623, %v2289
    %v2291 = vrot.slane %v2284, %v2290
    %v2292 = vlaneseq
    %v2293 = vshrl.u32 %v2292, 7
    %v2294 = vsub.s32 %v623, %v2293
    %v2295 = vrot.slane %v2287, %v2294
    %v2296 = vsel %vm521, %v2295, %v2291
    %2298 = vst.msk [vmem:[#allocation4] sm:$0x3] %vm387, %v2296
    %v2301 = vmul.f32 %v2284, %v1968
    %v2302 = vmul.f32 %v2287, %v1969
    %v2303 = vsel %vm676, %v2301, 0.0
    %v2304 = vrot.slane %v2303, 4
    %v2305 = vadd.f32 %v2303, %v2304
    %v2306 = vrot.slane %v2305, 2
    %v2307 = vadd.f32 %v2305, %v2306
    %v2308 = vrot.slane %v2307, 1
    %v2309 = vadd.f32 %v2307, %v2308
    %v2310 = vsel %vm676, %v2302, 0.0
    %v2311 = vrot.slane %v2310, 4
    %v2312 = vadd.f32 %v2310, %v2311
    %v2313 = vrot.slane %v2312, 2
    %v2314 = vadd.f32 %v2312, %v2313
    %v2315 = vrot.slane %v2314, 1
    %v2316 = vadd.f32 %v2314, %v2315
    %v2317 = vmax.f32 %v2309, 0.0
    %v2318 = vmax.f32 %v2316, 0.0
    %v2319 = vld [vmem:[%s6] sm:$0xff]
    %v2320 = vld [vmem:[%s6 + $0x8] sm:$0xff]
    %v2321 = vld [vmem:[%s6 + $0x10] sm:$0xff]
    %v2322 = vld [vmem:[%s6 + $0x18] sm:$0xff]
    %v2323 = vlaneseq
    %v2324 = vshrl.u32 %v2323, 7
    %v2325 = vsub.s32 6, %v2324
    %v2326 = vrot.slane %v36, %v2325
    %v2329 = vsel %vm521, %v2318, %v2317
    %v2330 = vsel %vm676, %v2329, 0
    %2332 = vmatprep.subr.mxu0 0.0
    %2333 = vmatpush1.msra.mxu0 %v2319
    %2334 = vmatprep.subr.mxu0 0.0
    %2335 = vmatpush1.msra.mxu0 %v2320
    %2336 = vmatprep.subr.mxu0 0.0
    %2337 = vmatpush1.msra.mxu0 %v2321
    %2338 = vmatprep.subr.mxu0 0.0
    %2339 = vmatpush1.msra.mxu0 %v2322
    %2340 = vmatprep.subr.mxu0 0.0
    %2341 = vmatpush1.msra.mxu0 0.0
    %2342 = vmatprep.subr.mxu0 0.0
    %2343 = vmatpush1.msra.mxu0 0.0
    %2344 = vmatprep.subr.mxu0 0.0
    %2345 = vmatpush1.msra.mxu0 0.0
    %2346 = vmatprep.subr.mxu0 0.0
    %2347 = vmatpush1.msra.mxu0 0.0
    %2348 = vmatprep.subr.mxu0 0.0
    %2349 = vmatpush1.msra.mxu0 0.0
    %2350 = vmatprep.subr.mxu0 0.0
    %2351 = vmatpush1.msra.mxu0 0.0
    %2352 = vmatprep.subr.mxu0 0.0
    %2353 = vmatpush1.msra.mxu0 0.0
    %2354 = vmatprep.subr.mxu0 0.0
    %2355 = vmatpush1.msra.mxu0 0.0
    %2356 = vmatprep.subr.mxu0 0.0
    %2357 = vmatpush1.msra.mxu0 0.0
    %2358 = vmatprep.subr.mxu0 0.0
    %2359 = vmatpush1.msra.mxu0 0.0
    %2360 = vmatprep.subr.mxu0 0.0
    %2361 = vmatpush1.msra.mxu0 0.0
    %2362 = vmatprep.subr.mxu0 0.0
    %2363 = vmatpush1.msra.mxu0 0.0
    %2364 = vmatprep.subr.mxu0 0.0
    %2365 = vmatpush1.msra.mxu0 0.0
    %2366 = vmatprep.subr.mxu0 0.0
    %2367 = vmatpush1.msra.mxu0 0.0
    %2368 = vmatprep.subr.mxu0 0.0
    %2369 = vmatpush1.msra.mxu0 0.0
    %2370 = vmatprep.subr.mxu0 0.0
    %2371 = vmatpush1.msra.mxu0 0.0
    %2372 = vmatprep.subr.mxu0 0.0
    %2373 = vmatpush1.msra.mxu0 0.0
    %2374 = vmatprep.subr.mxu0 0.0
    %2375 = vmatpush1.msra.mxu0 0.0
    %2376 = vmatprep.subr.mxu0 0.0
    %2377 = vmatpush1.msra.mxu0 0.0
    %2378 = vmatprep.subr.mxu0 0.0
    %2379 = vmatpush1.msra.mxu0 0.0
    %2380 = vmatprep.subr.mxu0 0.0
    %2381 = vmatpush1.msra.mxu0 0.0
    %2382 = vmatprep.subr.mxu0 0.0
    %2383 = vmatpush1.msra.mxu0 0.0
    %2384 = vmatprep.subr.mxu0 0.0
    %2385 = vmatpush1.msra.mxu0 0.0
    %2386 = vmatprep.subr.mxu0 0.0
    %2387 = vmatpush1.msra.mxu0 0.0
    %2388 = vmatprep.subr.mxu0 0.0
    %2389 = vmatpush1.msra.mxu0 0.0
    %2390 = vmatprep.subr.mxu0 0.0
    %2391 = vmatpush1.msra.mxu0 0.0
    %2392 = vmatprep.subr.mxu0 0.0
    %2393 = vmatpush1.msra.mxu0 0.0
    %2394 = vmatprep.subr.mxu0 0.0
    %2395 = vmatpush1.msra.mxu0 0.0
    %2396 = vmatprep.mubr.f32.mxu0 0.0
    %2397 = vmatmul.mubr.f32.gmra.mrb[0].mxu0 %v2330
    %v2398 = vpop.f32.mrb[0].mxu0
    %v2399 = vadd.f32 %v2326, %v2398
    %v2400 = vpop.f32.mrb[0].mxu0
    %2401 = vdwg.mxu0
    %v2402 = vmax.f32 %v2399, 0.0
    %v2403 = vld [vmem:[%s7] sm:$0xff]
    %v2404 = vld [vmem:[%s7 + $0x8] sm:$0xff]
    %v2405 = vld [vmem:[%s7 + $0x10] sm:$0xf]
    %v2406 = vlaneseq
    %v2407 = vshrl.u32 %v2406, 7
    %v2408 = vsub.s32 7, %v2407
    %v2409 = vrot.slane %v36, %v2408
    %v2411 = vsel %vm141, %v2402, 0
    %v2414 = vsel %vm118, %v2405, 0
    %2416 = vmatprep.subr.mxu0 0.0
    %2417 = vmatpush1.msra.mxu0 %v2403
    %2418 = vmatprep.subr.mxu0 0.0
    %2419 = vmatpush1.msra.mxu0 %v2404
    %2420 = vmatprep.subr.mxu0 0.0
    %2421 = vmatpush1.msra.mxu0 %v2414
    %2422 = vmatprep.subr.mxu0 0.0
    %2423 = vmatpush1.msra.mxu0 0.0
    %2424 = vmatprep.subr.mxu0 0.0
    %2425 = vmatpush1.msra.mxu0 0.0
    %2426 = vmatprep.subr.mxu0 0.0
    %2427 = vmatpush1.msra.mxu0 0.0
    %2428 = vmatprep.subr.mxu0 0.0
    %2429 = vmatpush1.msra.mxu0 0.0
    %2430 = vmatprep.subr.mxu0 0.0
    %2431 = vmatpush1.msra.mxu0 0.0
    %2432 = vmatprep.subr.mxu0 0.0
    %2433 = vmatpush1.msra.mxu0 0.0
    %2434 = vmatprep.subr.mxu0 0.0
    %2435 = vmatpush1.msra.mxu0 0.0
    %2436 = vmatprep.subr.mxu0 0.0
    %2437 = vmatpush1.msra.mxu0 0.0
    %2438 = vmatprep.subr.mxu0 0.0
    %2439 = vmatpush1.msra.mxu0 0.0
    %2440 = vmatprep.subr.mxu0 0.0
    %2441 = vmatpush1.msra.mxu0 0.0
    %2442 = vmatprep.subr.mxu0 0.0
    %2443 = vmatpush1.msra.mxu0 0.0
    %2444 = vmatprep.subr.mxu0 0.0
    %2445 = vmatpush1.msra.mxu0 0.0
    %2446 = vmatprep.subr.mxu0 0.0
    %2447 = vmatpush1.msra.mxu0 0.0
    %2448 = vmatprep.subr.mxu0 0.0
    %2449 = vmatpush1.msra.mxu0 0.0
    %2450 = vmatprep.subr.mxu0 0.0
    %2451 = vmatpush1.msra.mxu0 0.0
    %2452 = vmatprep.subr.mxu0 0.0
    %2453 = vmatpush1.msra.mxu0 0.0
    %2454 = vmatprep.subr.mxu0 0.0
    %2455 = vmatpush1.msra.mxu0 0.0
    %2456 = vmatprep.subr.mxu0 0.0
    %2457 = vmatpush1.msra.mxu0 0.0
    %2458 = vmatprep.subr.mxu0 0.0
    %2459 = vmatpush1.msra.mxu0 0.0
    %2460 = vmatprep.subr.mxu0 0.0
    %2461 = vmatpush1.msra.mxu0 0.0
    %2462 = vmatprep.subr.mxu0 0.0
    %2463 = vmatpush1.msra.mxu0 0.0
    %2464 = vmatprep.subr.mxu0 0.0
    %2465 = vmatpush1.msra.mxu0 0.0
    %2466 = vmatprep.subr.mxu0 0.0
    %2467 = vmatpush1.msra.mxu0 0.0
    %2468 = vmatprep.subr.mxu0 0.0
    %2469 = vmatpush1.msra.mxu0 0.0
    %2470 = vmatprep.subr.mxu0 0.0
    %2471 = vmatpush1.msra.mxu0 0.0
    %2472 = vmatprep.subr.mxu0 0.0
    %2473 = vmatpush1.msra.mxu0 0.0
    %2474 = vmatprep.subr.mxu0 0.0
    %2475 = vmatpush1.msra.mxu0 0.0
    %2476 = vmatprep.subr.mxu0 0.0
    %2477 = vmatpush1.msra.mxu0 0.0
    %2478 = vmatprep.subr.mxu0 0.0
    %2479 = vmatpush1.msra.mxu0 0.0
    %2480 = vmatprep.mubr.f32.mxu0 0.0
    %2481 = vmatmul.mubr.f32.gmra.mrb[0].mxu0 %v2411
    %v2482 = vpop.f32.mrb[0].mxu0
    %v2483 = vadd.f32 %v2409, %v2482
    %v2484 = vpop.f32.mrb[0].mxu0
    %2485 = vdwg.mxu0
    %vm2486 = vcmask 9216
    %v2487 = vsel %vm2486, %v2483, -inf
    %2488 = vmax.xlane.f32.xlu0 %v2487
    %v2489 = vpop.xlane.xlu0 %2488
    %v2490 = vsub.f32 %v2483, %v2489
    %v2491 = vmul.f32 %v2490, 1.442695
    %v2492 = vpow.pop %v2491
    %v2493 = vsel %vm2486, %v2492, 0.0
    %2494 = vadd.xlane.f32.xlu0 %v2493
    %v2495 = vpop.xlane.xlu0 %2494
    %v2496 = vrcp.pop %v2495
    %v2497 = vmul.f32 %v2492, %v2496
    %2498 = vst.msk [vmem:[#allocation2] sm:$0x3] %vm2486, %v2497
    // Predicated region
    $region38: #{_forward_impl.1} parent=1 // pred_check
      _
    $region39: #{_forward_impl.1} parent=1 // pred_check_branch
      %2500 = sbr.rel (0) target = $region41
    $region40: #{_forward_impl.1} parent=1 // pred_region
      %s2502 = ssub.s32 32, 32
      %2503 = vsyncadd [#allocation3], %s2502
      %s2505 = sshll.u32 [#allocation2], 4
      %s2506 = int_to_ptr.vmem [resolvable:$true] %s2505
      %2508 = dma.vmem_to_hbm [thread:$0]  %s2506, 32, %s9, [#allocation3]
    $region41: #{_forward_impl.1} parent=1 // pred_fallthru
      _
    // Predicated region
    $region42: #{_forward_impl.1} parent=1 // pred_check
      _
    $region43: #{_forward_impl.1} parent=1 // pred_check_branch
      %2510 = sbr.rel (0) target = $region45
    $region44: #{_forward_impl.1} parent=1 // pred_region
      %s2512 = ssub.s32 32, 32
      %2513 = vsyncadd [#allocation5], %s2512
      %s2515 = sshll.u32 [#allocation4], 4
      %s2516 = int_to_ptr.vmem [resolvable:$true] %s2515
      %2518 = dma.vmem_to_hbm [thread:$0]  %s2516, 32, %s10, [#allocation5]
    $region45: #{_forward_impl.1} parent=1 // pred_fallthru
      _
    // Predicated region
    $region46: #{_forward_impl.1} parent=1 // pred_check
      _
    $region47: #{_forward_impl.1} parent=1 // pred_check_branch
      %2520 = sbr.rel (0) target = $region49
    $region48: #{_forward_impl.1} parent=1 // pred_region
      %2521 = dma.done [#allocation3], 32
    $region49: #{_forward_impl.1} parent=1 // pred_fallthru
      _
    // Predicated region
    $region50: #{_forward_impl.1} parent=1 // pred_check
      _
    $region51: #{_forward_impl.1} parent=1 // pred_check_branch
      %2523 = sbr.rel (0) target = $region53
    $region52: #{_forward_impl.1} parent=1 // pred_region
      %2524 = dma.done [#allocation5], 32
    $region53: #{_forward_impl.1} parent=1 // pred_fallthru
      _
    %2525 = vsyncpa [#allocation3], 1
    %2526 = vsyncpa [#allocation5], 1

</llo_original>
